<compile_context>
chip_gen: v7x
topology: tpu7x:2x2x1
jax: 0.10.0
libtpu: 0.0.40
codegen_flags: <defaults>
</compile_context>

<pallas_src>
import functools
from math import sqrt

import jax
import jax.numpy as jnp
from jax.experimental import pallas as pl
from jax.experimental.pallas import tpu as pltpu


# Finite "-inf" so exp(masked - m) underflows to 0.0 instead of producing NaN
# (safer than -inf if a row ever ends up fully masked).
NEG_INF = -1e30


def _flash_attention_kernel(q_ref, k_ref, v_ref, o_ref, m_ref, l_ref, acc_ref,
                            *, scale, mask_flag, block_q, block_kv):
    # q_ref: (G, tq, E), k_ref: (G, tk, E), v_ref: (G, tk, D), o_ref: (G, tq, D)
    # scratch: m_ref/l_ref (G, tq, 1) f32, acc_ref (G, tq, D) f32
    qi = pl.program_id(1)
    kv = pl.program_id(2)

    @pl.when(kv == 0)
    def _init():
        m_ref[...] = jnp.full(m_ref.shape, NEG_INF, dtype=m_ref.dtype)
        l_ref[...] = jnp.zeros(l_ref.shape, dtype=l_ref.dtype)
        acc_ref[...] = jnp.zeros(acc_ref.shape, dtype=acc_ref.dtype)

    def _tile():
        q = q_ref[...]                       # (G, tq, E), input dtype
        k = k_ref[...]                       # (G, tk, E), input dtype
        # scores: contract E directly (no k.T relayout), f32 MXU accumulation.
        s = jnp.einsum('gqe,gke->gqk', q, k,
                       preferred_element_type=jnp.float32)   # (G, tq, tk) f32
        s = s * scale

        if mask_flag:
            # TriangularCausalMask: mask key index > query index (global ids).
            row = qi * block_q + jax.lax.broadcasted_iota(
                jnp.int32, (1, block_q, block_kv), 1)
            col = kv * block_kv + jax.lax.broadcasted_iota(
                jnp.int32, (1, block_q, block_kv), 2)
            s = jnp.where(col > row, NEG_INF, s)

        # Online softmax update.
        m_prev = m_ref[...]                                   # (G, tq, 1)
        m_new = jnp.maximum(m_prev, jnp.max(s, axis=-1, keepdims=True))
        alpha = jnp.exp(m_prev - m_new)
        p = jnp.exp(s - m_new)                                # (G, tq, tk) f32
        l_ref[...] = alpha * l_ref[...] + jnp.sum(p, axis=-1, keepdims=True)
        acc_ref[...] = alpha * acc_ref[...] + jnp.einsum(
            'gqk,gkd->gqd', p.astype(v_ref.dtype), v_ref[...],
            preferred_element_type=jnp.float32)
        m_ref[...] = m_new

    if mask_flag:
        # Causal: KV tiles entirely above the diagonal contribute nothing.
        pl.when(kv * block_kv <= qi * block_q + (block_q - 1))(_tile)
    else:
        _tile()

    @pl.when(kv == pl.num_programs(2) - 1)
    def _finalize():
        l = l_ref[...]
        inv = pl.reciprocal(l, approx=True)     # EUP vrcp (own VLIW slot)
        inv = inv * (2.0 - l * inv)             # Newton refinement -> ~f32 acc.
        inv = inv * (2.0 - l * inv)
        o_ref[...] = (acc_ref[...] * inv).astype(o_ref.dtype)


def _largest_divisor_leq(n, cap):
    best = 1
    for d in range(1, min(n, cap) + 1):
        if n % d == 0:
            best = d
    return best


def _pick_tile(dim, target):
    """Largest divisor of `dim` <= target that is a multiple of 8 (TPU sublane
    tiling of the second-to-last block dim), falling back to the full dim."""
    if dim <= target:
        return dim
    best = 0
    for t in range(8, target + 1, 8):
        if dim % t == 0:
            best = t
    return best if best else dim


def full_attention(queries, keys, values, attn_mask=None, *,
                   mask_flag=True, scale=None, output_attention=False,
                   block_q=128, block_kv=256, head_group=None,
                   vmem_limit_bytes=None):
    """Pallas TPU implementation of FullAttention.forward (eval mode).

    queries: (B, L, H, E), keys: (B, S, H, E), values: (B, S, H, D)
    Returns (V, None) with V of shape (B, H, L, D), matching torch 'bhle'.

    Defaults (block_q=128, block_kv=256) fit comfortably inside the 32 MiB
    scoped-VMEM default on v5e/v6e/v7x; on v5e/v6e you can raise them (e.g.
    512/1024) together with vmem_limit_bytes, on v7x (64 MiB VMEM) keep tiles
    modest and rely on its higher HBM bandwidth.
    """
    B, L, H, E = queries.shape
    _, S, _, D = values.shape
    if mask_flag and attn_mask is not None:
        raise NotImplementedError(
            "only the default TriangularCausalMask (attn_mask=None) is supported")
    del attn_mask

    scale_val = float(scale) if scale is not None else 1.0 / sqrt(E)

    # (B, L, H, E) -> (B*H, L, E), etc.  (see TODO(synk) at top of file)
    q = jnp.transpose(queries, (0, 2, 1, 3)).reshape(B * H, L, E)
    k = jnp.transpose(keys, (0, 2, 1, 3)).reshape(B * H, S, E)
    v = jnp.transpose(values, (0, 2, 1, 3)).reshape(B * H, S, D)

    BH = B * H
    if head_group is None:
        # Pack more (batch, head) pairs per grid step when head dims are small
        # so each step does enough work to amortize pipeline overhead.
        target_g = max(1, 512 // max(E, D, 1))
        head_group = _largest_divisor_leq(BH, target_g)
    G = head_group
    assert BH % G == 0, "head_group must divide B*H"

    tq = _pick_tile(L, block_q)
    tk = _pick_tile(S, block_kv)
    grid = (BH // G, L // tq, S // tk)

    kernel = functools.partial(
        _flash_attention_kernel, scale=scale_val, mask_flag=mask_flag,
        block_q=tq, block_kv=tk)

    out = pl.pallas_call(
        kernel,
        out_shape=jax.ShapeDtypeStruct((BH, L, D), queries.dtype),
        grid_spec=pltpu.PrefetchScalarGridSpec(
            num_scalar_prefetch=0,
            grid=grid,
            in_specs=[
                pl.BlockSpec((G, tq, E), lambda g, i, j: (g, i, 0)),
                pl.BlockSpec((G, tk, E), lambda g, i, j: (g, j, 0)),
                pl.BlockSpec((G, tk, D), lambda g, i, j: (g, j, 0)),
            ],
            out_specs=pl.BlockSpec((G, tq, D), lambda g, i, j: (g, i, 0)),
            scratch_shapes=[
                pltpu.VMEM((G, tq, 1), jnp.float32),   # running max m
                pltpu.VMEM((G, tq, 1), jnp.float32),   # running sum l
                pltpu.VMEM((G, tq, D), jnp.float32),   # output accumulator
            ],
        ),
        compiler_params=pltpu.CompilerParams(
            dimension_semantics=("parallel", "parallel", "arbitrary"),
            vmem_limit_bytes=vmem_limit_bytes),
    )(q, k, v)

    V = out.reshape(B, H, L, D)
    # output_attention=False in the reference config -> second output is None.
    return V, None


def _reference(queries, keys, values, *, mask_flag=True, scale=None):
    B, L, H, E = queries.shape
    scale_val = scale if scale is not None else 1.0 / sqrt(E)
    scores = jnp.einsum('blhe,bshe->bhls', queries, keys)
    if mask_flag:
        S = keys.shape[1]
        mask = jnp.triu(jnp.ones((L, S), dtype=bool), k=1)
        scores = jnp.where(mask[None, None], -jnp.inf, scores)
    A = jax.nn.softmax(scale_val * scores, axis=-1)
    return jnp.einsum('bhls,bshe->bhle', A, values)


if __name__ == "__main__":
    key = jax.random.PRNGKey(0)
    B, L, S, H, E, D = 2, 8, 8, 4, 32, 32
    kq, kk, kv = jax.random.split(key, 3)
    queries = jax.random.normal(kq, (B, L, H, E), dtype=jnp.float32)
    keys = jax.random.normal(kk, (B, S, H, E), dtype=jnp.float32)
    values = jax.random.normal(kv, (B, S, H, D), dtype=jnp.float32)

    # Causal (default module config).
    V, attn = full_attention(queries, keys, values, None,
                             mask_flag=True, scale=None,
                             output_attention=False)
    V = jax.block_until_ready(V)
    V_ref = _reference(queries, keys, values, mask_flag=True, scale=None)
    assert V.shape == (B, H, L, D)
    assert attn is None
    assert jnp.allclose(V, V_ref, atol=1e-4, rtol=1e-3)

    # Non-masked path.
    V2, _ = full_attention(queries, keys, values, None,
                           mask_flag=False, scale=None,
                           output_attention=False)
    V2 = jax.block_until_ready(V2)
    V2_ref = _reference(queries, keys, values, mask_flag=False, scale=None)
    assert jnp.allclose(V2, V2_ref, atol=1e-4, rtol=1e-3)

    print("KERNEL_OK")
</pallas_src>

<mosaic_0001>
module attributes {stable_mosaic.version = 11 : i64} {
  func.func @_flash_attention_kernel(%arg0: i32, %arg1: i32, %arg2: i32, %arg3: memref<8x8x32xf32, #tpu.memory_space<vmem>>, %arg4: memref<8x8x32xf32, #tpu.memory_space<vmem>>, %arg5: memref<8x8x32xf32, #tpu.memory_space<vmem>>, %arg6: memref<8x8x32xf32, #tpu.memory_space<vmem>>, %arg7: memref<8x8x1xf32, #tpu.memory_space<vmem>>, %arg8: memref<8x8x1xf32, #tpu.memory_space<vmem>>, %arg9: memref<8x8x32xf32, #tpu.memory_space<vmem>>) attributes {dimension_semantics = [#tpu.dimension_semantics<parallel>, #tpu.dimension_semantics<parallel>, #tpu.dimension_semantics<arbitrary>], iteration_bounds = array<i64: 1, 1, 1>, scalar_prefetch = 0 : i64, scratch_operands = 3 : i64, tpu.core_type = #tpu.core_type<tc>, window_params = [{transform_indices = @transform_0, window_bounds = array<i64: 8, 8, 32>}, {transform_indices = @transform_1, window_bounds = array<i64: 8, 8, 32>}, {transform_indices = @transform_2, window_bounds = array<i64: 8, 8, 32>}, {transform_indices = @transform_3, window_bounds = array<i64: 8, 8, 32>}]} {
    %c0_i32 = arith.constant 0 : i32
    %0 = arith.cmpi eq, %arg2, %c0_i32 : i32
    %1 = arith.extui %0 : i1 to i32
    %c0_i32_0 = arith.constant 0 : i32
    %2 = arith.cmpi ne, %1, %c0_i32_0 : i32
    scf.if %2 {
      %cst = arith.constant -1.000000e+30 : f32
      %12 = vector.broadcast %cst : f32 to vector<8x8x1xf32>
      %c0 = arith.constant 0 : index
      %c0_5 = arith.constant 0 : index
      %c0_6 = arith.constant 0 : index
      %13 = vector.load %arg7[%c0, %c0_5, %c0_6] : memref<8x8x1xf32, #tpu.memory_space<vmem>>, vector<8x8x1xf32>
      tpu.vector_store %arg7[%c0, %c0_5, %c0_6], %12 {strides = array<i32>} : memref<8x8x1xf32, #tpu.memory_space<vmem>>, vector<8x8x1xf32>,
      %cst_7 = arith.constant 0.000000e+00 : f32
      %14 = vector.broadcast %cst_7 : f32 to vector<8x8x1xf32>
      %c0_8 = arith.constant 0 : index
      %c0_9 = arith.constant 0 : index
      %c0_10 = arith.constant 0 : index
      %15 = vector.load %arg8[%c0_8, %c0_9, %c0_10] : memref<8x8x1xf32, #tpu.memory_space<vmem>>, vector<8x8x1xf32>
      tpu.vector_store %arg8[%c0_8, %c0_9, %c0_10], %14 {strides = array<i32>} : memref<8x8x1xf32, #tpu.memory_space<vmem>>, vector<8x8x1xf32>,
      %cst_11 = arith.constant 0.000000e+00 : f32
      %16 = vector.broadcast %cst_11 : f32 to vector<8x8x32xf32>
      %c0_12 = arith.constant 0 : index
      %c0_13 = arith.constant 0 : index
      %c0_14 = arith.constant 0 : index
      %17 = vector.load %arg9[%c0_12, %c0_13, %c0_14] : memref<8x8x32xf32, #tpu.memory_space<vmem>>, vector<8x8x32xf32>
      tpu.vector_store %arg9[%c0_12, %c0_13, %c0_14], %16 {strides = array<i32>} : memref<8x8x32xf32, #tpu.memory_space<vmem>>, vector<8x8x32xf32>,
    } else {
    }
    %c8_i32 = arith.constant 8 : i32
    %3 = arith.muli %arg2, %c8_i32 : i32
    %c8_i32_1 = arith.constant 8 : i32
    %4 = arith.muli %arg1, %c8_i32_1 : i32
    %c7_i32 = arith.constant 7 : i32
    %5 = arith.addi %4, %c7_i32 : i32
    %6 = arith.cmpi sle, %3, %5 : i32
    %7 = arith.extui %6 : i1 to i32
    %c0_i32_2 = arith.constant 0 : i32
    %8 = arith.cmpi ne, %7, %c0_i32_2 : i32
    scf.if %8 {
      %c0 = arith.constant 0 : index
      %c0_5 = arith.constant 0 : index
      %c0_6 = arith.constant 0 : index
      %12 = vector.load %arg3[%c0, %c0_5, %c0_6] : memref<8x8x32xf32, #tpu.memory_space<vmem>>, vector<8x8x32xf32>
      %c0_7 = arith.constant 0 : index
      %c0_8 = arith.constant 0 : index
      %c0_9 = arith.constant 0 : index
      %13 = vector.load %arg4[%c0_7, %c0_8, %c0_9] : memref<8x8x32xf32, #tpu.memory_space<vmem>>, vector<8x8x32xf32>
      "tpu.trace_start"() <{level = 10 : i32, message = "gqe,gke->gqk"}> : () -> ()
      %cst = arith.constant dense<0.000000e+00> : vector<8x8x8xf32>
      %14 = tpu.matmul %12, %13, %cst {dimension_numbers = #tpu.dot_dimension_numbers<[2], [2], [1], [1], [0, 0, 0, 1, 1, 1], [0], [0]>} : vector<8x8x32xf32>, vector<8x8x32xf32>, vector<8x8x8xf32> -> vector<8x8x8xf32>
      "tpu.trace_stop"() : () -> ()
      %cst_10 = arith.constant 0.176776692 : f32
      %15 = vector.broadcast %cst_10 : f32 to vector<8x8x8xf32>
      %16 = arith.mulf %14, %15 : vector<8x8x8xf32>
      %c8_i32_11 = arith.constant 8 : i32
      %17 = arith.muli %arg1, %c8_i32_11 : i32
      %18 = tpu.iota {dimensions = array<i32: 1>} : vector<1x8x8xi32>
      %19 = vector.broadcast %17 : i32 to vector<1x8x8xi32>
      %20 = arith.addi %19, %18 : vector<1x8x8xi32>
      %c8_i32_12 = arith.constant 8 : i32
      %21 = arith.muli %arg2, %c8_i32_12 : i32
      %22 = tpu.iota {dimensions = array<i32: 2>} : vector<1x8x8xi32>
      %23 = vector.broadcast %21 : i32 to vector<1x8x8xi32>
      %24 = arith.addi %23, %22 : vector<1x8x8xi32>
      %25 = arith.cmpi sgt, %24, %20 : vector<1x8x8xi32>
      %cst_13 = arith.constant -1.000000e+30 : f32
      %26 = vector.shape_cast %25 : vector<1x8x8xi1> to vector<1x8x8xi1>
      %27 = vector.broadcast %26 : vector<1x8x8xi1> to vector<8x8x8xi1>
      %28 = vector.broadcast %cst_13 : f32 to vector<8x8x8xf32>
      %29 = arith.select %27, %28, %16 : vector<8x8x8xi1>, vector<8x8x8xf32>
      %c0_14 = arith.constant 0 : index
      %c0_15 = arith.constant 0 : index
      %c0_16 = arith.constant 0 : index
      %30 = vector.load %arg7[%c0_14, %c0_15, %c0_16] : memref<8x8x1xf32, #tpu.memory_space<vmem>>, vector<8x8x1xf32>
      %cst_17 = arith.constant dense<0xFF800000> : vector<8x8xf32>
      %31 = vector.multi_reduction <maximumf>, %29, %cst_17 [2] : vector<8x8x8xf32> to vector<8x8xf32>
      %32 = vector.shape_cast %31 : vector<8x8xf32> to vector<8x8x1xf32>
      %33 = arith.maximumf %30, %32 : vector<8x8x1xf32>
      %34 = arith.subf %30, %33 : vector<8x8x1xf32>
      %35 = math.exp %34 : vector<8x8x1xf32>
      %36 = vector.broadcast %33 : vector<8x8x1xf32> to vector<8x8x8xf32>
      %37 = arith.subf %29, %36 : vector<8x8x8xf32>
      %38 = math.exp %37 : vector<8x8x8xf32>
      %c0_18 = arith.constant 0 : index
      %c0_19 = arith.constant 0 : index
      %c0_20 = arith.constant 0 : index
      %39 = vector.load %arg8[%c0_18, %c0_19, %c0_20] : memref<8x8x1xf32, #tpu.memory_space<vmem>>, vector<8x8x1xf32>
      %40 = arith.mulf %35, %39 : vector<8x8x1xf32>
      %cst_21 = arith.constant dense<0.000000e+00> : vector<8x8xf32>
      %41 = vector.multi_reduction <add>, %38, %cst_21 [2] : vector<8x8x8xf32> to vector<8x8xf32>
      %42 = vector.shape_cast %41 : vector<8x8xf32> to vector<8x8x1xf32>
      %43 = arith.addf %40, %42 : vector<8x8x1xf32>
      %c0_22 = arith.constant 0 : index
      %c0_23 = arith.constant 0 : index
      %c0_24 = arith.constant 0 : index
      %44 = vector.load %arg8[%c0_22, %c0_23, %c0_24] : memref<8x8x1xf32, #tpu.memory_space<vmem>>, vector<8x8x1xf32>
      tpu.vector_store %arg8[%c0_22, %c0_23, %c0_24], %43 {strides = array<i32>} : memref<8x8x1xf32, #tpu.memory_space<vmem>>, vector<8x8x1xf32>,
      %c0_25 = arith.constant 0 : index
      %c0_26 = arith.constant 0 : index
      %c0_27 = arith.constant 0 : index
      %45 = vector.load %arg9[%c0_25, %c0_26, %c0_27] : memref<8x8x32xf32, #tpu.memory_space<vmem>>, vector<8x8x32xf32>
      %46 = vector.broadcast %35 : vector<8x8x1xf32> to vector<8x8x32xf32>
      %47 = arith.mulf %46, %45 : vector<8x8x32xf32>
      %c0_28 = arith.constant 0 : index
      %c0_29 = arith.constant 0 : index
      %c0_30 = arith.constant 0 : index
      %48 = vector.load %arg5[%c0_28, %c0_29, %c0_30] : memref<8x8x32xf32, #tpu.memory_space<vmem>>, vector<8x8x32xf32>
      "tpu.trace_start"() <{level = 10 : i32, message = "gqk,gkd->gqd"}> : () -> ()
      %cst_31 = arith.constant dense<0.000000e+00> : vector<8x8x32xf32>
      %49 = tpu.matmul %38, %48, %cst_31 {dimension_numbers = #tpu.dot_dimension_numbers<[2], [1], [1], [2], [0, 0, 0, 1, 1, 2], [0], [0]>} : vector<8x8x8xf32>, vector<8x8x32xf32>, vector<8x8x32xf32> -> vector<8x8x32xf32>
      "tpu.trace_stop"() : () -> ()
      %50 = arith.addf %47, %49 : vector<8x8x32xf32>
      %c0_32 = arith.constant 0 : index
      %c0_33 = arith.constant 0 : index
      %c0_34 = arith.constant 0 : index
      %51 = vector.load %arg9[%c0_32, %c0_33, %c0_34] : memref<8x8x32xf32, #tpu.memory_space<vmem>>, vector<8x8x32xf32>
      tpu.vector_store %arg9[%c0_32, %c0_33, %c0_34], %50 {strides = array<i32>} : memref<8x8x32xf32, #tpu.memory_space<vmem>>, vector<8x8x32xf32>,
      %c0_35 = arith.constant 0 : index
      %c0_36 = arith.constant 0 : index
      %c0_37 = arith.constant 0 : index
      %52 = vector.load %arg7[%c0_35, %c0_36, %c0_37] : memref<8x8x1xf32, #tpu.memory_space<vmem>>, vector<8x8x1xf32>
      tpu.vector_store %arg7[%c0_35, %c0_36, %c0_37], %33 {strides = array<i32>} : memref<8x8x1xf32, #tpu.memory_space<vmem>>, vector<8x8x1xf32>,
    } else {
    }
    %c0_i32_3 = arith.constant 0 : i32
    %9 = arith.cmpi eq, %arg2, %c0_i32_3 : i32
    %10 = arith.extui %9 : i1 to i32
    %c0_i32_4 = arith.constant 0 : i32
    %11 = arith.cmpi ne, %10, %c0_i32_4 : i32
    scf.if %11 {
      %c0 = arith.constant 0 : index
      %c0_5 = arith.constant 0 : index
      %c0_6 = arith.constant 0 : index
      %12 = vector.load %arg8[%c0, %c0_5, %c0_6] : memref<8x8x1xf32, #tpu.memory_space<vmem>>, vector<8x8x1xf32>
      %13 = tpu.reciprocal %12 {approx = true} : vector<8x8x1xf32> -> vector<8x8x1xf32>
      %14 = arith.mulf %12, %13 : vector<8x8x1xf32>
      %cst = arith.constant 2.000000e+00 : f32
      %15 = vector.broadcast %cst : f32 to vector<8x8x1xf32>
      %16 = arith.subf %15, %14 : vector<8x8x1xf32>
      %17 = arith.mulf %13, %16 : vector<8x8x1xf32>
      %18 = arith.mulf %12, %17 : vector<8x8x1xf32>
      %cst_7 = arith.constant 2.000000e+00 : f32
      %19 = vector.broadcast %cst_7 : f32 to vector<8x8x1xf32>
      %20 = arith.subf %19, %18 : vector<8x8x1xf32>
      %21 = arith.mulf %17, %20 : vector<8x8x1xf32>
      %c0_8 = arith.constant 0 : index
      %c0_9 = arith.constant 0 : index
      %c0_10 = arith.constant 0 : index
      %22 = vector.load %arg9[%c0_8, %c0_9, %c0_10] : memref<8x8x32xf32, #tpu.memory_space<vmem>>, vector<8x8x32xf32>
      %23 = vector.broadcast %21 : vector<8x8x1xf32> to vector<8x8x32xf32>
      %24 = arith.mulf %22, %23 : vector<8x8x32xf32>
      %c0_11 = arith.constant 0 : index
      %c0_12 = arith.constant 0 : index
      %c0_13 = arith.constant 0 : index
      %25 = vector.load %arg6[%c0_11, %c0_12, %c0_13] : memref<8x8x32xf32, #tpu.memory_space<vmem>>, vector<8x8x32xf32>
      tpu.vector_store %arg6[%c0_11, %c0_12, %c0_13], %24 {strides = array<i32>} : memref<8x8x32xf32, #tpu.memory_space<vmem>>, vector<8x8x32xf32>,
    } else {
    }
    return
  }
  func.func @transform_0(%arg0: i32, %arg1: i32, %arg2: i32) -> (i32, i32, i32) {
    %c0_i32 = arith.constant 0 : i32
    %c0_i32_0 = arith.constant 0 : i32
    return %arg0, %arg1, %c0_i32 : i32, i32, i32
  }
  func.func @transform_1(%arg0: i32, %arg1: i32, %arg2: i32) -> (i32, i32, i32) {
    %c0_i32 = arith.constant 0 : i32
    %c0_i32_0 = arith.constant 0 : i32
    return %arg0, %arg2, %c0_i32 : i32, i32, i32
  }
  func.func @transform_2(%arg0: i32, %arg1: i32, %arg2: i32) -> (i32, i32, i32) {
    %c0_i32 = arith.constant 0 : i32
    %c0_i32_0 = arith.constant 0 : i32
    return %arg0, %arg2, %c0_i32 : i32, i32, i32
  }
  func.func @transform_3(%arg0: i32, %arg1: i32, %arg2: i32) -> (i32, i32, i32) {
    %c0_i32 = arith.constant 0 : i32
    %c0_i32_0 = arith.constant 0 : i32
    return %arg0, %arg1, %c0_i32 : i32, i32, i32
  }
}

</mosaic_0001>

<llo_original>
// kernel: tpu_custom_call.1
$region0: #{tpu_custom_call.1}
  #allocation0 [shape = 'u32[]', space=smem, size = 0x4, offset = 0x4, fixed_abs, tag = 'smem constant byte address 0x4 - core index']
  #allocation1 [shape = 'u32[144,128]{1,0:T(1,128)}', space=vmem, size = 0x12000, scoped, tag = 'internal scratch']
  #allocation2 [shape = 'f32[8,8,1]{2,1,0:T(8,128)}', space=vmem, size = 0x8000, scoped, tag = 'scratch operand']
  #allocation3 [shape = 'f32[8,8,1]{2,1,0:T(8,128)}', space=vmem, size = 0x8000, scoped, tag = 'scratch operand']
  #allocation4 [shape = 'f32[8,8,32]{2,1,0:T(8,128)}', space=vmem, size = 0x8000, scoped, tag = 'scratch operand']
  %s0 = inlined_call_operand.hbm [shape: f32[8,8,32], index: 0, kind: input, shape index: {}]
  %s1 = inlined_call_operand.hbm [shape: f32[8,8,32], index: 1, kind: input, shape index: {}]
  %s2 = inlined_call_operand.hbm [shape: f32[8,8,32], index: 2, kind: input, shape index: {}]
  %s3 = inlined_call_operand.hbm [shape: f32[8,8,32], index: 3, kind: output, shape index: {}]
  %s4 = sld [smem:[#allocation0]]
  $region46: #{tpu_custom_call.1} parent=0
    _
  %s6 = ssub.s32 1, %s4
  %s7 = scalar_select 0, %s6, %s4
  $region1: #{tpu_custom_call.1} parent=0
    #allocation5 [shape = 'u8[32768]{0}', space=vmem, size = 0x8000, scoped, tag = 'input window, operand 0, single buffered']
    #allocation6 [shape = 's32[1]{0}', space=sflag, size = 0x4, scoped, tag = 'scoped memory for tpu_custom_call.1']
    #allocation7 [shape = 's32[1]{0}', space=sflag, size = 0x4, scoped, tag = 'scoped memory for tpu_custom_call.1']
    #allocation8 [shape = 'u8[32768]{0}', space=vmem, size = 0x8000, scoped, tag = 'input window, operand 1, single buffered']
    #allocation9 [shape = 's32[1]{0}', space=sflag, size = 0x4, scoped, tag = 'scoped memory for tpu_custom_call.1']
    #allocation10 [shape = 'u8[32768]{0}', space=vmem, size = 0x8000, scoped, tag = 'input window, operand 2, single buffered']
    #allocation11 [shape = 'u8[32768]{0}', space=vmem, size = 0x8000, scoped, tag = 'output window, operand 0, single buffered']
    %8 = vsyncpa [#allocation6], 0
    %9 = vsyncpa [#allocation9], 0
    %10 = vsyncpa [#allocation7], 0
    // Predicated region
    $region2: #{tpu_custom_call.1} parent=1 // pred_check
      _
    $region3: #{tpu_custom_call.1} parent=1 // pred_check_branch
      %12 = sbr.rel (0) target = $region5
    $region4: #{tpu_custom_call.1} parent=1 // pred_region
      %s14 = ssub.s32 1024, 1024
      %15 = vsyncadd [#allocation6], %s14
      %s16 = sshll.u32 [#allocation5], 4
      %s17 = int_to_ptr.vmem [resolvable:$true] %s16
      %22 = dma.hbm_to_vmem [thread:$0]  %s0, 1024, %s17, [#allocation6], 128, 128, 8
    $region5: #{tpu_custom_call.1} parent=1 // pred_fallthru
      _
    // Predicated region
    $region6: #{tpu_custom_call.1} parent=1 // pred_check
      _
    $region7: #{tpu_custom_call.1} parent=1 // pred_check_branch
      %24 = sbr.rel (0) target = $region9
    $region8: #{tpu_custom_call.1} parent=1 // pred_region
      %s26 = ssub.s32 1024, 1024
      %27 = vsyncadd [#allocation9], %s26
      %s28 = sshll.u32 [#allocation8], 4
      %s29 = int_to_ptr.vmem [resolvable:$true] %s28
      %34 = dma.hbm_to_vmem [thread:$0]  %s1, 1024, %s29, [#allocation9], 128, 128, 8
    $region9: #{tpu_custom_call.1} parent=1 // pred_fallthru
      _
    // Predicated region
    $region10: #{tpu_custom_call.1} parent=1 // pred_check
      _
    $region11: #{tpu_custom_call.1} parent=1 // pred_check_branch
      %36 = sbr.rel (0) target = $region13
    $region12: #{tpu_custom_call.1} parent=1 // pred_region
      %s38 = ssub.s32 1024, 1024
      %39 = vsyncadd [#allocation9], %s38
      %s40 = sshll.u32 [#allocation10], 4
      %s41 = int_to_ptr.vmem [resolvable:$true] %s40
      %46 = dma.hbm_to_vmem [thread:$0]  %s2, 1024, %s41, [#allocation9], 128, 128, 8
    $region13: #{tpu_custom_call.1} parent=1 // pred_fallthru
      _
    // Predicated region
    $region14: #{tpu_custom_call.1} parent=1 // pred_check
      _
    $region15: #{tpu_custom_call.1} parent=1 // pred_check_branch
      %48 = sbr.rel (0) target = $region17
    $region16: #{tpu_custom_call.1} parent=1 // pred_region
      %49 = dma.done [#allocation6], 1024
    $region17: #{tpu_custom_call.1} parent=1 // pred_fallthru
      _
    // Predicated region
    $region18: #{tpu_custom_call.1} parent=1 // pred_check
      _
    $region19: #{tpu_custom_call.1} parent=1 // pred_check_branch
      %51 = sbr.rel (0) target = $region21
    $region20: #{tpu_custom_call.1} parent=1 // pred_region
      %52 = dma.done [#allocation9], 1024
    $region21: #{tpu_custom_call.1} parent=1 // pred_fallthru
      _
    // Predicated region
    $region22: #{tpu_custom_call.1} parent=1 // pred_check
      _
    $region23: #{tpu_custom_call.1} parent=1 // pred_check_branch
      %54 = sbr.rel (0) target = $region25
    $region24: #{tpu_custom_call.1} parent=1 // pred_region
      %55 = dma.done [#allocation9], 1024
    $region25: #{tpu_custom_call.1} parent=1 // pred_fallthru
      _
    %p56 = scmp.eq.s32.totalorder 0, 0
    // Predicated region
    $region26: #{tpu_custom_call.1} parent=1 // pred_check
      %p57 = pneg %p56
    $region27: #{tpu_custom_call.1} parent=1 // pred_check_branch
      %59 = sbr.rel (%p57) target = $region29
    $region28: #{tpu_custom_call.1} parent=1 // pred_region
      %vm60 = vcmask 7168
      %61 = vst.msk [vmem:[#allocation2] sm:$0xff] %vm60, -1e+30
      %62 = vst.msk [vmem:[#allocation2 + $0x8] sm:$0xff] %vm60, -1e+30
      %63 = vst.msk [vmem:[#allocation2 + $0x10] sm:$0xff] %vm60, -1e+30
      %64 = vst.msk [vmem:[#allocation2 + $0x18] sm:$0xff] %vm60, -1e+30
      %65 = vst.msk [vmem:[#allocation2 + $0x20] sm:$0xff] %vm60, -1e+30
      %66 = vst.msk [vmem:[#allocation2 + $0x28] sm:$0xff] %vm60, -1e+30
      %67 = vst.msk [vmem:[#allocation2 + $0x30] sm:$0xff] %vm60, -1e+30
      %68 = vst.msk [vmem:[#allocation2 + $0x38] sm:$0xff] %vm60, -1e+30
      %69 = vst.msk [vmem:[#allocation3] sm:$0xff] %vm60, 0.0
      %70 = vst.msk [vmem:[#allocation3 + $0x8] sm:$0xff] %vm60, 0.0
      %71 = vst.msk [vmem:[#allocation3 + $0x10] sm:$0xff] %vm60, 0.0
      %72 = vst.msk [vmem:[#allocation3 + $0x18] sm:$0xff] %vm60, 0.0
      %73 = vst.msk [vmem:[#allocation3 + $0x20] sm:$0xff] %vm60, 0.0
      %74 = vst.msk [vmem:[#allocation3 + $0x28] sm:$0xff] %vm60, 0.0
      %75 = vst.msk [vmem:[#allocation3 + $0x30] sm:$0xff] %vm60, 0.0
      %76 = vst.msk [vmem:[#allocation3 + $0x38] sm:$0xff] %vm60, 0.0
      %vm77 = vcmask 261120
      %78 = vst.msk [vmem:[#allocation4] sm:$0xff] %vm77, 0.0
      %79 = vst.msk [vmem:[#allocation4 + $0x8] sm:$0xff] %vm77, 0.0
      %80 = vst.msk [vmem:[#allocation4 + $0x10] sm:$0xff] %vm77, 0.0
      %81 = vst.msk [vmem:[#allocation4 + $0x18] sm:$0xff] %vm77, 0.0
      %82 = vst.msk [vmem:[#allocation4 + $0x20] sm:$0xff] %vm77, 0.0
      %83 = vst.msk [vmem:[#allocation4 + $0x28] sm:$0xff] %vm77, 0.0
      %84 = vst.msk [vmem:[#allocation4 + $0x30] sm:$0xff] %vm77, 0.0
      %85 = vst.msk [vmem:[#allocation4 + $0x38] sm:$0xff] %vm77, 0.0
    $region29: #{tpu_custom_call.1} parent=1 // pred_fallthru
      _
    %s86 = smul.u32 0, 8
    %s87 = smul.u32 0, 8
    %s88 = sadd.s32 %s87, 7
    %p89 = scmp.le.s32.totalorder %s86, %s88
    // Predicated region
    $region30: #{tpu_custom_call.1} parent=1 // pred_check
      %p90 = pneg %p89
    $region31: #{tpu_custom_call.1} parent=1 // pred_check_branch
      %92 = sbr.rel (%p90) target = $region33
    $region32: #{tpu_custom_call.1} parent=1 // pred_region
      %v93 = vld [vmem:[#allocation5] sm:$0xff]
      %v94 = vld [vmem:[#allocation5 + $0x8] sm:$0xff]
      %v95 = vld [vmem:[#allocation5 + $0x10] sm:$0xff]
      %v96 = vld [vmem:[#allocation5 + $0x18] sm:$0xff]
      %v97 = vld [vmem:[#allocation5 + $0x20] sm:$0xff]
      %v98 = vld [vmem:[#allocation5 + $0x28] sm:$0xff]
      %v99 = vld [vmem:[#allocation5 + $0x30] sm:$0xff]
      %v100 = vld [vmem:[#allocation5 + $0x38] sm:$0xff]
      %v101 = vld [vmem:[#allocation8] sm:$0xff]
      %v102 = vld [vmem:[#allocation8 + $0x8] sm:$0xff]
      %v103 = vld [vmem:[#allocation8 + $0x10] sm:$0xff]
      %v104 = vld [vmem:[#allocation8 + $0x18] sm:$0xff]
      %v105 = vld [vmem:[#allocation8 + $0x20] sm:$0xff]
      %v106 = vld [vmem:[#allocation8 + $0x28] sm:$0xff]
      %v107 = vld [vmem:[#allocation8 + $0x30] sm:$0xff]
      %v108 = vld [vmem:[#allocation8 + $0x38] sm:$0xff]
      %vm109 = vcmask 261120
      %v111 = vsel %vm109, %v93, 0
      %v114 = vsel %vm109, %v101, 0
      %116 = vmatprep.subr.mxu0 0.0
      %117 = vmatpush1.xpose.msra.mxu0 %v114
      %118 = vmatprep.subr.mxu0 0.0
      %119 = vmatpush1.xpose.msra.mxu0 0.0
      %120 = vmatprep.subr.mxu0 0.0
      %121 = vmatpush1.xpose.msra.mxu0 0.0
      %122 = vmatprep.subr.mxu0 0.0
      %123 = vmatpush1.xpose.msra.mxu0 0.0
      %124 = vmatprep.subr.mxu0 0.0
      %125 = vmatpush1.xpose.msra.mxu0 0.0
      %126 = vmatprep.subr.mxu0 0.0
      %127 = vmatpush1.xpose.msra.mxu0 0.0
      %128 = vmatprep.subr.mxu0 0.0
      %129 = vmatpush1.xpose.msra.mxu0 0.0
      %130 = vmatprep.subr.mxu0 0.0
      %131 = vmatpush1.xpose.msra.mxu0 0.0
      %132 = vmatprep.subr.mxu0 0.0
      %133 = vmatpush1.xpose.msra.mxu0 0.0
      %134 = vmatprep.subr.mxu0 0.0
      %135 = vmatpush1.xpose.msra.mxu0 0.0
      %136 = vmatprep.subr.mxu0 0.0
      %137 = vmatpush1.xpose.msra.mxu0 0.0
      %138 = vmatprep.subr.mxu0 0.0
      %139 = vmatpush1.xpose.msra.mxu0 0.0
      %140 = vmatprep.subr.mxu0 0.0
      %141 = vmatpush1.xpose.msra.mxu0 0.0
      %142 = vmatprep.subr.mxu0 0.0
      %143 = vmatpush1.xpose.msra.mxu0 0.0
      %144 = vmatprep.subr.mxu0 0.0
      %145 = vmatpush1.xpose.msra.mxu0 0.0
      %146 = vmatprep.subr.mxu0 0.0
      %147 = vmatpush1.xpose.msra.mxu0 0.0
      %148 = vmatprep.subr.mxu0 0.0
      %149 = vmatpush1.xpose.msra.mxu0 0.0
      %150 = vmatprep.subr.mxu0 0.0
      %151 = vmatpush1.xpose.msra.mxu0 0.0
      %152 = vmatprep.subr.mxu0 0.0
      %153 = vmatpush1.xpose.msra.mxu0 0.0
      %154 = vmatprep.subr.mxu0 0.0
      %155 = vmatpush1.xpose.msra.mxu0 0.0
      %156 = vmatprep.subr.mxu0 0.0
      %157 = vmatpush1.xpose.msra.mxu0 0.0
      %158 = vmatprep.subr.mxu0 0.0
      %159 = vmatpush1.xpose.msra.mxu0 0.0
      %160 = vmatprep.subr.mxu0 0.0
      %161 = vmatpush1.xpose.msra.mxu0 0.0
      %162 = vmatprep.subr.mxu0 0.0
      %163 = vmatpush1.xpose.msra.mxu0 0.0
      %164 = vmatprep.subr.mxu0 0.0
      %165 = vmatpush1.xpose.msra.mxu0 0.0
      %166 = vmatprep.subr.mxu0 0.0
      %167 = vmatpush1.xpose.msra.mxu0 0.0
      %168 = vmatprep.subr.mxu0 0.0
      %169 = vmatpush1.xpose.msra.mxu0 0.0
      %170 = vmatprep.subr.mxu0 0.0
      %171 = vmatpush1.xpose.msra.mxu0 0.0
      %172 = vmatprep.subr.mxu0 0.0
      %173 = vmatpush1.xpose.msra.mxu0 0.0
      %174 = vmatprep.subr.mxu0 0.0
      %175 = vmatpush1.xpose.msra.mxu0 0.0
      %176 = vmatprep.subr.mxu0 0.0
      %177 = vmatpush1.xpose.msra.mxu0 0.0
      %178 = vmatprep.subr.mxu0 0.0
      %179 = vmatpush1.xpose.msra.mxu0 0.0
      %180 = vmatprep.mubr.f32.mxu0 0.0
      %181 = vmatmul.mubr.f32.gmra.mrb[0].mxu0 %v111
      %v182 = vpop.f32.mrb[0].mxu0
      %v183 = vadd.f32 0.0, %v182
      %v184 = vpop.f32.mrb[0].mxu0
      %185 = vdwg.mxu0
      %v187 = vsel %vm109, %v94, 0
      %v190 = vsel %vm109, %v102, 0
      %192 = vmatprep.subr.mxu0 0.0
      %193 = vmatpush1.xpose.msra.mxu0 %v190
      %194 = vmatprep.subr.mxu0 0.0
      %195 = vmatpush1.xpose.msra.mxu0 0.0
      %196 = vmatprep.subr.mxu0 0.0
      %197 = vmatpush1.xpose.msra.mxu0 0.0
      %198 = vmatprep.subr.mxu0 0.0
      %199 = vmatpush1.xpose.msra.mxu0 0.0
      %200 = vmatprep.subr.mxu0 0.0
      %201 = vmatpush1.xpose.msra.mxu0 0.0
      %202 = vmatprep.subr.mxu0 0.0
      %203 = vmatpush1.xpose.msra.mxu0 0.0
      %204 = vmatprep.subr.mxu0 0.0
      %205 = vmatpush1.xpose.msra.mxu0 0.0
      %206 = vmatprep.subr.mxu0 0.0
      %207 = vmatpush1.xpose.msra.mxu0 0.0
      %208 = vmatprep.subr.mxu0 0.0
      %209 = vmatpush1.xpose.msra.mxu0 0.0
      %210 = vmatprep.subr.mxu0 0.0
      %211 = vmatpush1.xpose.msra.mxu0 0.0
      %212 = vmatprep.subr.mxu0 0.0
      %213 = vmatpush1.xpose.msra.mxu0 0.0
      %214 = vmatprep.subr.mxu0 0.0
      %215 = vmatpush1.xpose.msra.mxu0 0.0
      %216 = vmatprep.subr.mxu0 0.0
      %217 = vmatpush1.xpose.msra.mxu0 0.0
      %218 = vmatprep.subr.mxu0 0.0
      %219 = vmatpush1.xpose.msra.mxu0 0.0
      %220 = vmatprep.subr.mxu0 0.0
      %221 = vmatpush1.xpose.msra.mxu0 0.0
      %222 = vmatprep.subr.mxu0 0.0
      %223 = vmatpush1.xpose.msra.mxu0 0.0
      %224 = vmatprep.subr.mxu0 0.0
      %225 = vmatpush1.xpose.msra.mxu0 0.0
      %226 = vmatprep.subr.mxu0 0.0
      %227 = vmatpush1.xpose.msra.mxu0 0.0
      %228 = vmatprep.subr.mxu0 0.0
      %229 = vmatpush1.xpose.msra.mxu0 0.0
      %230 = vmatprep.subr.mxu0 0.0
      %231 = vmatpush1.xpose.msra.mxu0 0.0
      %232 = vmatprep.subr.mxu0 0.0
      %233 = vmatpush1.xpose.msra.mxu0 0.0
      %234 = vmatprep.subr.mxu0 0.0
      %235 = vmatpush1.xpose.msra.mxu0 0.0
      %236 = vmatprep.subr.mxu0 0.0
      %237 = vmatpush1.xpose.msra.mxu0 0.0
      %238 = vmatprep.subr.mxu0 0.0
      %239 = vmatpush1.xpose.msra.mxu0 0.0
      %240 = vmatprep.subr.mxu0 0.0
      %241 = vmatpush1.xpose.msra.mxu0 0.0
      %242 = vmatprep.subr.mxu0 0.0
      %243 = vmatpush1.xpose.msra.mxu0 0.0
      %244 = vmatprep.subr.mxu0 0.0
      %245 = vmatpush1.xpose.msra.mxu0 0.0
      %246 = vmatprep.subr.mxu0 0.0
      %247 = vmatpush1.xpose.msra.mxu0 0.0
      %248 = vmatprep.subr.mxu0 0.0
      %249 = vmatpush1.xpose.msra.mxu0 0.0
      %250 = vmatprep.subr.mxu0 0.0
      %251 = vmatpush1.xpose.msra.mxu0 0.0
      %252 = vmatprep.subr.mxu0 0.0
      %253 = vmatpush1.xpose.msra.mxu0 0.0
      %254 = vmatprep.subr.mxu0 0.0
      %255 = vmatpush1.xpose.msra.mxu0 0.0
      %256 = vmatprep.mubr.f32.mxu0 0.0
      %257 = vmatmul.mubr.f32.gmra.mrb[0].mxu0 %v187
      %v258 = vpop.f32.mrb[0].mxu0
      %v259 = vadd.f32 0.0, %v258
      %v260 = vpop.f32.mrb[0].mxu0
      %261 = vdwg.mxu0
      %v263 = vsel %vm109, %v95, 0
      %v266 = vsel %vm109, %v103, 0
      %268 = vmatprep.subr.mxu0 0.0
      %269 = vmatpush1.xpose.msra.mxu0 %v266
      %270 = vmatprep.subr.mxu0 0.0
      %271 = vmatpush1.xpose.msra.mxu0 0.0
      %272 = vmatprep.subr.mxu0 0.0
      %273 = vmatpush1.xpose.msra.mxu0 0.0
      %274 = vmatprep.subr.mxu0 0.0
      %275 = vmatpush1.xpose.msra.mxu0 0.0
      %276 = vmatprep.subr.mxu0 0.0
      %277 = vmatpush1.xpose.msra.mxu0 0.0
      %278 = vmatprep.subr.mxu0 0.0
      %279 = vmatpush1.xpose.msra.mxu0 0.0
      %280 = vmatprep.subr.mxu0 0.0
      %281 = vmatpush1.xpose.msra.mxu0 0.0
      %282 = vmatprep.subr.mxu0 0.0
      %283 = vmatpush1.xpose.msra.mxu0 0.0
      %284 = vmatprep.subr.mxu0 0.0
      %285 = vmatpush1.xpose.msra.mxu0 0.0
      %286 = vmatprep.subr.mxu0 0.0
      %287 = vmatpush1.xpose.msra.mxu0 0.0
      %288 = vmatprep.subr.mxu0 0.0
      %289 = vmatpush1.xpose.msra.mxu0 0.0
      %290 = vmatprep.subr.mxu0 0.0
      %291 = vmatpush1.xpose.msra.mxu0 0.0
      %292 = vmatprep.subr.mxu0 0.0
      %293 = vmatpush1.xpose.msra.mxu0 0.0
      %294 = vmatprep.subr.mxu0 0.0
      %295 = vmatpush1.xpose.msra.mxu0 0.0
      %296 = vmatprep.subr.mxu0 0.0
      %297 = vmatpush1.xpose.msra.mxu0 0.0
      %298 = vmatprep.subr.mxu0 0.0
      %299 = vmatpush1.xpose.msra.mxu0 0.0
      %300 = vmatprep.subr.mxu0 0.0
      %301 = vmatpush1.xpose.msra.mxu0 0.0
      %302 = vmatprep.subr.mxu0 0.0
      %303 = vmatpush1.xpose.msra.mxu0 0.0
      %304 = vmatprep.subr.mxu0 0.0
      %305 = vmatpush1.xpose.msra.mxu0 0.0
      %306 = vmatprep.subr.mxu0 0.0
      %307 = vmatpush1.xpose.msra.mxu0 0.0
      %308 = vmatprep.subr.mxu0 0.0
      %309 = vmatpush1.xpose.msra.mxu0 0.0
      %310 = vmatprep.subr.mxu0 0.0
      %311 = vmatpush1.xpose.msra.mxu0 0.0
      %312 = vmatprep.subr.mxu0 0.0
      %313 = vmatpush1.xpose.msra.mxu0 0.0
      %314 = vmatprep.subr.mxu0 0.0
      %315 = vmatpush1.xpose.msra.mxu0 0.0
      %316 = vmatprep.subr.mxu0 0.0
      %317 = vmatpush1.xpose.msra.mxu0 0.0
      %318 = vmatprep.subr.mxu0 0.0
      %319 = vmatpush1.xpose.msra.mxu0 0.0
      %320 = vmatprep.subr.mxu0 0.0
      %321 = vmatpush1.xpose.msra.mxu0 0.0
      %322 = vmatprep.subr.mxu0 0.0
      %323 = vmatpush1.xpose.msra.mxu0 0.0
      %324 = vmatprep.subr.mxu0 0.0
      %325 = vmatpush1.xpose.msra.mxu0 0.0
      %326 = vmatprep.subr.mxu0 0.0
      %327 = vmatpush1.xpose.msra.mxu0 0.0
      %328 = vmatprep.subr.mxu0 0.0
      %329 = vmatpush1.xpose.msra.mxu0 0.0
      %330 = vmatprep.subr.mxu0 0.0
      %331 = vmatpush1.xpose.msra.mxu0 0.0
      %332 = vmatprep.mubr.f32.mxu0 0.0
      %333 = vmatmul.mubr.f32.gmra.mrb[0].mxu0 %v263
      %v334 = vpop.f32.mrb[0].mxu0
      %v335 = vadd.f32 0.0, %v334
      %v336 = vpop.f32.mrb[0].mxu0
      %337 = vdwg.mxu0
      %v339 = vsel %vm109, %v96, 0
      %v342 = vsel %vm109, %v104, 0
      %344 = vmatprep.subr.mxu0 0.0
      %345 = vmatpush1.xpose.msra.mxu0 %v342
      %346 = vmatprep.subr.mxu0 0.0
      %347 = vmatpush1.xpose.msra.mxu0 0.0
      %348 = vmatprep.subr.mxu0 0.0
      %349 = vmatpush1.xpose.msra.mxu0 0.0
      %350 = vmatprep.subr.mxu0 0.0
      %351 = vmatpush1.xpose.msra.mxu0 0.0
      %352 = vmatprep.subr.mxu0 0.0
      %353 = vmatpush1.xpose.msra.mxu0 0.0
      %354 = vmatprep.subr.mxu0 0.0
      %355 = vmatpush1.xpose.msra.mxu0 0.0
      %356 = vmatprep.subr.mxu0 0.0
      %357 = vmatpush1.xpose.msra.mxu0 0.0
      %358 = vmatprep.subr.mxu0 0.0
      %359 = vmatpush1.xpose.msra.mxu0 0.0
      %360 = vmatprep.subr.mxu0 0.0
      %361 = vmatpush1.xpose.msra.mxu0 0.0
      %362 = vmatprep.subr.mxu0 0.0
      %363 = vmatpush1.xpose.msra.mxu0 0.0
      %364 = vmatprep.subr.mxu0 0.0
      %365 = vmatpush1.xpose.msra.mxu0 0.0
      %366 = vmatprep.subr.mxu0 0.0
      %367 = vmatpush1.xpose.msra.mxu0 0.0
      %368 = vmatprep.subr.mxu0 0.0
      %369 = vmatpush1.xpose.msra.mxu0 0.0
      %370 = vmatprep.subr.mxu0 0.0
      %371 = vmatpush1.xpose.msra.mxu0 0.0
      %372 = vmatprep.subr.mxu0 0.0
      %373 = vmatpush1.xpose.msra.mxu0 0.0
      %374 = vmatprep.subr.mxu0 0.0
      %375 = vmatpush1.xpose.msra.mxu0 0.0
      %376 = vmatprep.subr.mxu0 0.0
      %377 = vmatpush1.xpose.msra.mxu0 0.0
      %378 = vmatprep.subr.mxu0 0.0
      %379 = vmatpush1.xpose.msra.mxu0 0.0
      %380 = vmatprep.subr.mxu0 0.0
      %381 = vmatpush1.xpose.msra.mxu0 0.0
      %382 = vmatprep.subr.mxu0 0.0
      %383 = vmatpush1.xpose.msra.mxu0 0.0
      %384 = vmatprep.subr.mxu0 0.0
      %385 = vmatpush1.xpose.msra.mxu0 0.0
      %386 = vmatprep.subr.mxu0 0.0
      %387 = vmatpush1.xpose.msra.mxu0 0.0
      %388 = vmatprep.subr.mxu0 0.0
      %389 = vmatpush1.xpose.msra.mxu0 0.0
      %390 = vmatprep.subr.mxu0 0.0
      %391 = vmatpush1.xpose.msra.mxu0 0.0
      %392 = vmatprep.subr.mxu0 0.0
      %393 = vmatpush1.xpose.msra.mxu0 0.0
      %394 = vmatprep.subr.mxu0 0.0
      %395 = vmatpush1.xpose.msra.mxu0 0.0
      %396 = vmatprep.subr.mxu0 0.0
      %397 = vmatpush1.xpose.msra.mxu0 0.0
      %398 = vmatprep.subr.mxu0 0.0
      %399 = vmatpush1.xpose.msra.mxu0 0.0
      %400 = vmatprep.subr.mxu0 0.0
      %401 = vmatpush1.xpose.msra.mxu0 0.0
      %402 = vmatprep.subr.mxu0 0.0
      %403 = vmatpush1.xpose.msra.mxu0 0.0
      %404 = vmatprep.subr.mxu0 0.0
      %405 = vmatpush1.xpose.msra.mxu0 0.0
      %406 = vmatprep.subr.mxu0 0.0
      %407 = vmatpush1.xpose.msra.mxu0 0.0
      %408 = vmatprep.mubr.f32.mxu0 0.0
      %409 = vmatmul.mubr.f32.gmra.mrb[0].mxu0 %v339
      %v410 = vpop.f32.mrb[0].mxu0
      %v411 = vadd.f32 0.0, %v410
      %v412 = vpop.f32.mrb[0].mxu0
      %413 = vdwg.mxu0
      %v415 = vsel %vm109, %v97, 0
      %v418 = vsel %vm109, %v105, 0
      %420 = vmatprep.subr.mxu0 0.0
      %421 = vmatpush1.xpose.msra.mxu0 %v418
      %422 = vmatprep.subr.mxu0 0.0
      %423 = vmatpush1.xpose.msra.mxu0 0.0
      %424 = vmatprep.subr.mxu0 0.0
      %425 = vmatpush1.xpose.msra.mxu0 0.0
      %426 = vmatprep.subr.mxu0 0.0
      %427 = vmatpush1.xpose.msra.mxu0 0.0
      %428 = vmatprep.subr.mxu0 0.0
      %429 = vmatpush1.xpose.msra.mxu0 0.0
      %430 = vmatprep.subr.mxu0 0.0
      %431 = vmatpush1.xpose.msra.mxu0 0.0
      %432 = vmatprep.subr.mxu0 0.0
      %433 = vmatpush1.xpose.msra.mxu0 0.0
      %434 = vmatprep.subr.mxu0 0.0
      %435 = vmatpush1.xpose.msra.mxu0 0.0
      %436 = vmatprep.subr.mxu0 0.0
      %437 = vmatpush1.xpose.msra.mxu0 0.0
      %438 = vmatprep.subr.mxu0 0.0
      %439 = vmatpush1.xpose.msra.mxu0 0.0
      %440 = vmatprep.subr.mxu0 0.0
      %441 = vmatpush1.xpose.msra.mxu0 0.0
      %442 = vmatprep.subr.mxu0 0.0
      %443 = vmatpush1.xpose.msra.mxu0 0.0
      %444 = vmatprep.subr.mxu0 0.0
      %445 = vmatpush1.xpose.msra.mxu0 0.0
      %446 = vmatprep.subr.mxu0 0.0
      %447 = vmatpush1.xpose.msra.mxu0 0.0
      %448 = vmatprep.subr.mxu0 0.0
      %449 = vmatpush1.xpose.msra.mxu0 0.0
      %450 = vmatprep.subr.mxu0 0.0
      %451 = vmatpush1.xpose.msra.mxu0 0.0
      %452 = vmatprep.subr.mxu0 0.0
      %453 = vmatpush1.xpose.msra.mxu0 0.0
      %454 = vmatprep.subr.mxu0 0.0
      %455 = vmatpush1.xpose.msra.mxu0 0.0
      %456 = vmatprep.subr.mxu0 0.0
      %457 = vmatpush1.xpose.msra.mxu0 0.0
      %458 = vmatprep.subr.mxu0 0.0
      %459 = vmatpush1.xpose.msra.mxu0 0.0
      %460 = vmatprep.subr.mxu0 0.0
      %461 = vmatpush1.xpose.msra.mxu0 0.0
      %462 = vmatprep.subr.mxu0 0.0
      %463 = vmatpush1.xpose.msra.mxu0 0.0
      %464 = vmatprep.subr.mxu0 0.0
      %465 = vmatpush1.xpose.msra.mxu0 0.0
      %466 = vmatprep.subr.mxu0 0.0
      %467 = vmatpush1.xpose.msra.mxu0 0.0
      %468 = vmatprep.subr.mxu0 0.0
      %469 = vmatpush1.xpose.msra.mxu0 0.0
      %470 = vmatprep.subr.mxu0 0.0
      %471 = vmatpush1.xpose.msra.mxu0 0.0
      %472 = vmatprep.subr.mxu0 0.0
      %473 = vmatpush1.xpose.msra.mxu0 0.0
      %474 = vmatprep.subr.mxu0 0.0
      %475 = vmatpush1.xpose.msra.mxu0 0.0
      %476 = vmatprep.subr.mxu0 0.0
      %477 = vmatpush1.xpose.msra.mxu0 0.0
      %478 = vmatprep.subr.mxu0 0.0
      %479 = vmatpush1.xpose.msra.mxu0 0.0
      %480 = vmatprep.subr.mxu0 0.0
      %481 = vmatpush1.xpose.msra.mxu0 0.0
      %482 = vmatprep.subr.mxu0 0.0
      %483 = vmatpush1.xpose.msra.mxu0 0.0
      %484 = vmatprep.mubr.f32.mxu0 0.0
      %485 = vmatmul.mubr.f32.gmra.mrb[0].mxu0 %v415
      %v486 = vpop.f32.mrb[0].mxu0
      %v487 = vadd.f32 0.0, %v486
      %v488 = vpop.f32.mrb[0].mxu0
      %489 = vdwg.mxu0
      %v491 = vsel %vm109, %v98, 0
      %v494 = vsel %vm109, %v106, 0
      %496 = vmatprep.subr.mxu0 0.0
      %497 = vmatpush1.xpose.msra.mxu0 %v494
      %498 = vmatprep.subr.mxu0 0.0
      %499 = vmatpush1.xpose.msra.mxu0 0.0
      %500 = vmatprep.subr.mxu0 0.0
      %501 = vmatpush1.xpose.msra.mxu0 0.0
      %502 = vmatprep.subr.mxu0 0.0
      %503 = vmatpush1.xpose.msra.mxu0 0.0
      %504 = vmatprep.subr.mxu0 0.0
      %505 = vmatpush1.xpose.msra.mxu0 0.0
      %506 = vmatprep.subr.mxu0 0.0
      %507 = vmatpush1.xpose.msra.mxu0 0.0
      %508 = vmatprep.subr.mxu0 0.0
      %509 = vmatpush1.xpose.msra.mxu0 0.0
      %510 = vmatprep.subr.mxu0 0.0
      %511 = vmatpush1.xpose.msra.mxu0 0.0
      %512 = vmatprep.subr.mxu0 0.0
      %513 = vmatpush1.xpose.msra.mxu0 0.0
      %514 = vmatprep.subr.mxu0 0.0
      %515 = vmatpush1.xpose.msra.mxu0 0.0
      %516 = vmatprep.subr.mxu0 0.0
      %517 = vmatpush1.xpose.msra.mxu0 0.0
      %518 = vmatprep.subr.mxu0 0.0
      %519 = vmatpush1.xpose.msra.mxu0 0.0
      %520 = vmatprep.subr.mxu0 0.0
      %521 = vmatpush1.xpose.msra.mxu0 0.0
      %522 = vmatprep.subr.mxu0 0.0
      %523 = vmatpush1.xpose.msra.mxu0 0.0
      %524 = vmatprep.subr.mxu0 0.0
      %525 = vmatpush1.xpose.msra.mxu0 0.0
      %526 = vmatprep.subr.mxu0 0.0
      %527 = vmatpush1.xpose.msra.mxu0 0.0
      %528 = vmatprep.subr.mxu0 0.0
      %529 = vmatpush1.xpose.msra.mxu0 0.0
      %530 = vmatprep.subr.mxu0 0.0
      %531 = vmatpush1.xpose.msra.mxu0 0.0
      %532 = vmatprep.subr.mxu0 0.0
      %533 = vmatpush1.xpose.msra.mxu0 0.0
      %534 = vmatprep.subr.mxu0 0.0
      %535 = vmatpush1.xpose.msra.mxu0 0.0
      %536 = vmatprep.subr.mxu0 0.0
      %537 = vmatpush1.xpose.msra.mxu0 0.0
      %538 = vmatprep.subr.mxu0 0.0
      %539 = vmatpush1.xpose.msra.mxu0 0.0
      %540 = vmatprep.subr.mxu0 0.0
      %541 = vmatpush1.xpose.msra.mxu0 0.0
      %542 = vmatprep.subr.mxu0 0.0
      %543 = vmatpush1.xpose.msra.mxu0 0.0
      %544 = vmatprep.subr.mxu0 0.0
      %545 = vmatpush1.xpose.msra.mxu0 0.0
      %546 = vmatprep.subr.mxu0 0.0
      %547 = vmatpush1.xpose.msra.mxu0 0.0
      %548 = vmatprep.subr.mxu0 0.0
      %549 = vmatpush1.xpose.msra.mxu0 0.0
      %550 = vmatprep.subr.mxu0 0.0
      %551 = vmatpush1.xpose.msra.mxu0 0.0
      %552 = vmatprep.subr.mxu0 0.0
      %553 = vmatpush1.xpose.msra.mxu0 0.0
      %554 = vmatprep.subr.mxu0 0.0
      %555 = vmatpush1.xpose.msra.mxu0 0.0
      %556 = vmatprep.subr.mxu0 0.0
      %557 = vmatpush1.xpose.msra.mxu0 0.0
      %558 = vmatprep.subr.mxu0 0.0
      %559 = vmatpush1.xpose.msra.mxu0 0.0
      %560 = vmatprep.mubr.f32.mxu0 0.0
      %561 = vmatmul.mubr.f32.gmra.mrb[0].mxu0 %v491
      %v562 = vpop.f32.mrb[0].mxu0
      %v563 = vadd.f32 0.0, %v562
      %v564 = vpop.f32.mrb[0].mxu0
      %565 = vdwg.mxu0
      %v567 = vsel %vm109, %v99, 0
      %v570 = vsel %vm109, %v107, 0
      %572 = vmatprep.subr.mxu0 0.0
      %573 = vmatpush1.xpose.msra.mxu0 %v570
      %574 = vmatprep.subr.mxu0 0.0
      %575 = vmatpush1.xpose.msra.mxu0 0.0
      %576 = vmatprep.subr.mxu0 0.0
      %577 = vmatpush1.xpose.msra.mxu0 0.0
      %578 = vmatprep.subr.mxu0 0.0
      %579 = vmatpush1.xpose.msra.mxu0 0.0
      %580 = vmatprep.subr.mxu0 0.0
      %581 = vmatpush1.xpose.msra.mxu0 0.0
      %582 = vmatprep.subr.mxu0 0.0
      %583 = vmatpush1.xpose.msra.mxu0 0.0
      %584 = vmatprep.subr.mxu0 0.0
      %585 = vmatpush1.xpose.msra.mxu0 0.0
      %586 = vmatprep.subr.mxu0 0.0
      %587 = vmatpush1.xpose.msra.mxu0 0.0
      %588 = vmatprep.subr.mxu0 0.0
      %589 = vmatpush1.xpose.msra.mxu0 0.0
      %590 = vmatprep.subr.mxu0 0.0
      %591 = vmatpush1.xpose.msra.mxu0 0.0
      %592 = vmatprep.subr.mxu0 0.0
      %593 = vmatpush1.xpose.msra.mxu0 0.0
      %594 = vmatprep.subr.mxu0 0.0
      %595 = vmatpush1.xpose.msra.mxu0 0.0
      %596 = vmatprep.subr.mxu0 0.0
      %597 = vmatpush1.xpose.msra.mxu0 0.0
      %598 = vmatprep.subr.mxu0 0.0
      %599 = vmatpush1.xpose.msra.mxu0 0.0
      %600 = vmatprep.subr.mxu0 0.0
      %601 = vmatpush1.xpose.msra.mxu0 0.0
      %602 = vmatprep.subr.mxu0 0.0
      %603 = vmatpush1.xpose.msra.mxu0 0.0
      %604 = vmatprep.subr.mxu0 0.0
      %605 = vmatpush1.xpose.msra.mxu0 0.0
      %606 = vmatprep.subr.mxu0 0.0
      %607 = vmatpush1.xpose.msra.mxu0 0.0
      %608 = vmatprep.subr.mxu0 0.0
      %609 = vmatpush1.xpose.msra.mxu0 0.0
      %610 = vmatprep.subr.mxu0 0.0
      %611 = vmatpush1.xpose.msra.mxu0 0.0
      %612 = vmatprep.subr.mxu0 0.0
      %613 = vmatpush1.xpose.msra.mxu0 0.0
      %614 = vmatprep.subr.mxu0 0.0
      %615 = vmatpush1.xpose.msra.mxu0 0.0
      %616 = vmatprep.subr.mxu0 0.0
      %617 = vmatpush1.xpose.msra.mxu0 0.0
      %618 = vmatprep.subr.mxu0 0.0
      %619 = vmatpush1.xpose.msra.mxu0 0.0
      %620 = vmatprep.subr.mxu0 0.0
      %621 = vmatpush1.xpose.msra.mxu0 0.0
      %622 = vmatprep.subr.mxu0 0.0
      %623 = vmatpush1.xpose.msra.mxu0 0.0
      %624 = vmatprep.subr.mxu0 0.0
      %625 = vmatpush1.xpose.msra.mxu0 0.0
      %626 = vmatprep.subr.mxu0 0.0
      %627 = vmatpush1.xpose.msra.mxu0 0.0
      %628 = vmatprep.subr.mxu0 0.0
      %629 = vmatpush1.xpose.msra.mxu0 0.0
      %630 = vmatprep.subr.mxu0 0.0
      %631 = vmatpush1.xpose.msra.mxu0 0.0
      %632 = vmatprep.subr.mxu0 0.0
      %633 = vmatpush1.xpose.msra.mxu0 0.0
      %634 = vmatprep.subr.mxu0 0.0
      %635 = vmatpush1.xpose.msra.mxu0 0.0
      %636 = vmatprep.mubr.f32.mxu0 0.0
      %637 = vmatmul.mubr.f32.gmra.mrb[0].mxu0 %v567
      %v638 = vpop.f32.mrb[0].mxu0
      %v639 = vadd.f32 0.0, %v638
      %v640 = vpop.f32.mrb[0].mxu0
      %641 = vdwg.mxu0
      %v643 = vsel %vm109, %v100, 0
      %v646 = vsel %vm109, %v108, 0
      %648 = vmatprep.subr.mxu0 0.0
      %649 = vmatpush1.xpose.msra.mxu0 %v646
      %650 = vmatprep.subr.mxu0 0.0
      %651 = vmatpush1.xpose.msra.mxu0 0.0
      %652 = vmatprep.subr.mxu0 0.0
      %653 = vmatpush1.xpose.msra.mxu0 0.0
      %654 = vmatprep.subr.mxu0 0.0
      %655 = vmatpush1.xpose.msra.mxu0 0.0
      %656 = vmatprep.subr.mxu0 0.0
      %657 = vmatpush1.xpose.msra.mxu0 0.0
      %658 = vmatprep.subr.mxu0 0.0
      %659 = vmatpush1.xpose.msra.mxu0 0.0
      %660 = vmatprep.subr.mxu0 0.0
      %661 = vmatpush1.xpose.msra.mxu0 0.0
      %662 = vmatprep.subr.mxu0 0.0
      %663 = vmatpush1.xpose.msra.mxu0 0.0
      %664 = vmatprep.subr.mxu0 0.0
      %665 = vmatpush1.xpose.msra.mxu0 0.0
      %666 = vmatprep.subr.mxu0 0.0
      %667 = vmatpush1.xpose.msra.mxu0 0.0
      %668 = vmatprep.subr.mxu0 0.0
      %669 = vmatpush1.xpose.msra.mxu0 0.0
      %670 = vmatprep.subr.mxu0 0.0
      %671 = vmatpush1.xpose.msra.mxu0 0.0
      %672 = vmatprep.subr.mxu0 0.0
      %673 = vmatpush1.xpose.msra.mxu0 0.0
      %674 = vmatprep.subr.mxu0 0.0
      %675 = vmatpush1.xpose.msra.mxu0 0.0
      %676 = vmatprep.subr.mxu0 0.0
      %677 = vmatpush1.xpose.msra.mxu0 0.0
      %678 = vmatprep.subr.mxu0 0.0
      %679 = vmatpush1.xpose.msra.mxu0 0.0
      %680 = vmatprep.subr.mxu0 0.0
      %681 = vmatpush1.xpose.msra.mxu0 0.0
      %682 = vmatprep.subr.mxu0 0.0
      %683 = vmatpush1.xpose.msra.mxu0 0.0
      %684 = vmatprep.subr.mxu0 0.0
      %685 = vmatpush1.xpose.msra.mxu0 0.0
      %686 = vmatprep.subr.mxu0 0.0
      %687 = vmatpush1.xpose.msra.mxu0 0.0
      %688 = vmatprep.subr.mxu0 0.0
      %689 = vmatpush1.xpose.msra.mxu0 0.0
      %690 = vmatprep.subr.mxu0 0.0
      %691 = vmatpush1.xpose.msra.mxu0 0.0
      %692 = vmatprep.subr.mxu0 0.0
      %693 = vmatpush1.xpose.msra.mxu0 0.0
      %694 = vmatprep.subr.mxu0 0.0
      %695 = vmatpush1.xpose.msra.mxu0 0.0
      %696 = vmatprep.subr.mxu0 0.0
      %697 = vmatpush1.xpose.msra.mxu0 0.0
      %698 = vmatprep.subr.mxu0 0.0
      %699 = vmatpush1.xpose.msra.mxu0 0.0
      %700 = vmatprep.subr.mxu0 0.0
      %701 = vmatpush1.xpose.msra.mxu0 0.0
      %702 = vmatprep.subr.mxu0 0.0
      %703 = vmatpush1.xpose.msra.mxu0 0.0
      %704 = vmatprep.subr.mxu0 0.0
      %705 = vmatpush1.xpose.msra.mxu0 0.0
      %706 = vmatprep.subr.mxu0 0.0
      %707 = vmatpush1.xpose.msra.mxu0 0.0
      %708 = vmatprep.subr.mxu0 0.0
      %709 = vmatpush1.xpose.msra.mxu0 0.0
      %710 = vmatprep.subr.mxu0 0.0
      %711 = vmatpush1.xpose.msra.mxu0 0.0
      %712 = vmatprep.mubr.f32.mxu0 0.0
      %713 = vmatmul.mubr.f32.gmra.mrb[0].mxu0 %v643
      %v714 = vpop.f32.mrb[0].mxu0
      %v715 = vadd.f32 0.0, %v714
      %v716 = vpop.f32.mrb[0].mxu0
      %717 = vdwg.mxu0
      %v718 = vmul.f32 %v183, 0.17677669
      %v719 = vmul.f32 %v259, 0.17677669
      %v720 = vmul.f32 %v335, 0.17677669
      %v721 = vmul.f32 %v411, 0.17677669
      %v722 = vmul.f32 %v487, 0.17677669
      %v723 = vmul.f32 %v563, 0.17677669
      %v724 = vmul.f32 %v639, 0.17677669
      %v725 = vmul.f32 %v715, 0.17677669
      %v726 = vlaneseq
      %v727 = vshrl.u32 %v726, 7
      %v728 = vstv %s87
      %v729 = vadd.s32 %v728, %v727
      %v730 = vlaneseq
      %v731 = vand.u32 %v730, 127
      %v732 = vstv %s86
      %v733 = vadd.s32 %v732, %v731
      %vm734 = vcmp.gt.s32.totalorder %v733, %v729
      %v735 = vsel %vm734, 1, 0
      %vm736 = vcmp.eq.s32.totalorder %v735, 1
      %v737 = vsel %vm736, -1e+30, %v718
      %v738 = vsel %vm736, -1e+30, %v719
      %v739 = vsel %vm736, -1e+30, %v720
      %v740 = vsel %vm736, -1e+30, %v721
      %v741 = vsel %vm736, -1e+30, %v722
      %v742 = vsel %vm736, -1e+30, %v723
      %v743 = vsel %vm736, -1e+30, %v724
      %v744 = vsel %vm736, -1e+30, %v725
      %v745 = vld [vmem:[#allocation2] sm:$0xff]
      %v746 = vld [vmem:[#allocation2 + $0x8] sm:$0xff]
      %v747 = vld [vmem:[#allocation2 + $0x10] sm:$0xff]
      %v748 = vld [vmem:[#allocation2 + $0x18] sm:$0xff]
      %v749 = vld [vmem:[#allocation2 + $0x20] sm:$0xff]
      %v750 = vld [vmem:[#allocation2 + $0x28] sm:$0xff]
      %v751 = vld [vmem:[#allocation2 + $0x30] sm:$0xff]
      %v752 = vld [vmem:[#allocation2 + $0x38] sm:$0xff]
      %vm753 = vcmask 64512
      %v754 = vsel %vm753, %v737, -inf
      %755 = vmax.xlane.f32.xlu0 %v754
      %v756 = vpop.xlane.xlu0 %755
      %v757 = vsel %vm753, %v738, -inf
      %758 = vmax.xlane.f32.xlu0 %v757
      %v759 = vpop.xlane.xlu0 %758
      %v760 = vsel %vm753, %v739, -inf
      %761 = vmax.xlane.f32.xlu0 %v760
      %v762 = vpop.xlane.xlu0 %761
      %v763 = vsel %vm753, %v740, -inf
      %764 = vmax.xlane.f32.xlu0 %v763
      %v765 = vpop.xlane.xlu0 %764
      %v766 = vsel %vm753, %v741, -inf
      %767 = vmax.xlane.f32.xlu0 %v766
      %v768 = vpop.xlane.xlu0 %767
      %v769 = vsel %vm753, %v742, -inf
      %770 = vmax.xlane.f32.xlu0 %v769
      %v771 = vpop.xlane.xlu0 %770
      %v772 = vsel %vm753, %v743, -inf
      %773 = vmax.xlane.f32.xlu0 %v772
      %v774 = vpop.xlane.xlu0 %773
      %v775 = vsel %vm753, %v744, -inf
      %776 = vmax.xlane.f32.xlu0 %v775
      %v777 = vpop.xlane.xlu0 %776
      %v778 = vmax.f32 %v745, %v756
      %v779 = vmax.f32 %v746, %v759
      %v780 = vmax.f32 %v747, %v762
      %v781 = vmax.f32 %v748, %v765
      %v782 = vmax.f32 %v749, %v768
      %v783 = vmax.f32 %v750, %v771
      %v784 = vmax.f32 %v751, %v774
      %v785 = vmax.f32 %v752, %v777
      %v786 = vsub.f32 %v745, %v778
      %v787 = vsub.f32 %v746, %v779
      %v788 = vsub.f32 %v747, %v780
      %v789 = vsub.f32 %v748, %v781
      %v790 = vsub.f32 %v749, %v782
      %v791 = vsub.f32 %v750, %v783
      %v792 = vsub.f32 %v751, %v784
      %v793 = vsub.f32 %v752, %v785
      %v794 = vmul.f32 %v786, 1.442695
      %v795 = vpow.pop %v794
      %v796 = vmul.f32 %v787, 1.442695
      %v797 = vpow.pop %v796
      %v798 = vmul.f32 %v788, 1.442695
      %v799 = vpow.pop %v798
      %v800 = vmul.f32 %v789, 1.442695
      %v801 = vpow.pop %v800
      %v802 = vmul.f32 %v790, 1.442695
      %v803 = vpow.pop %v802
      %v804 = vmul.f32 %v791, 1.442695
      %v805 = vpow.pop %v804
      %v806 = vmul.f32 %v792, 1.442695
      %v807 = vpow.pop %v806
      %v808 = vmul.f32 %v793, 1.442695
      %v809 = vpow.pop %v808
      %811 = vset.pattern.permute.xlu0 0
      %812 = vperm.xlu0 %811, %v778
      %v813 = vpop.permute.xlu0 %812
      %816 = vset.pattern.permute.xlu0 0
      %817 = vperm.xlu0 %816, %v779
      %v818 = vpop.permute.xlu0 %817
      %821 = vset.pattern.permute.xlu0 0
      %822 = vperm.xlu0 %821, %v780
      %v823 = vpop.permute.xlu0 %822
      %826 = vset.pattern.permute.xlu0 0
      %827 = vperm.xlu0 %826, %v781
      %v828 = vpop.permute.xlu0 %827
      %831 = vset.pattern.permute.xlu0 0
      %832 = vperm.xlu0 %831, %v782
      %v833 = vpop.permute.xlu0 %832
      %836 = vset.pattern.permute.xlu0 0
      %837 = vperm.xlu0 %836, %v783
      %v838 = vpop.permute.xlu0 %837
      %841 = vset.pattern.permute.xlu0 0
      %842 = vperm.xlu0 %841, %v784
      %v843 = vpop.permute.xlu0 %842
      %846 = vset.pattern.permute.xlu0 0
      %847 = vperm.xlu0 %846, %v785
      %v848 = vpop.permute.xlu0 %847
      %v850 = vsub.f32 %v737, %v813
      %v851 = vsub.f32 %v738, %v818
      %v852 = vsub.f32 %v739, %v823
      %v853 = vsub.f32 %v740, %v828
      %v854 = vsub.f32 %v741, %v833
      %v855 = vsub.f32 %v742, %v838
      %v856 = vsub.f32 %v743, %v843
      %v857 = vsub.f32 %v744, %v848
      %v858 = vmul.f32 %v850, 1.442695
      %v859 = vpow.pop %v858
      %v860 = vmul.f32 %v851, 1.442695
      %v861 = vpow.pop %v860
      %v862 = vmul.f32 %v852, 1.442695
      %v863 = vpow.pop %v862
      %v864 = vmul.f32 %v853, 1.442695
      %v865 = vpow.pop %v864
      %v866 = vmul.f32 %v854, 1.442695
      %v867 = vpow.pop %v866
      %v868 = vmul.f32 %v855, 1.442695
      %v869 = vpow.pop %v868
      %v870 = vmul.f32 %v856, 1.442695
      %v871 = vpow.pop %v870
      %v872 = vmul.f32 %v857, 1.442695
      %v873 = vpow.pop %v872
      %v874 = vld [vmem:[#allocation3] sm:$0xff]
      %v875 = vld [vmem:[#allocation3 + $0x8] sm:$0xff]
      %v876 = vld [vmem:[#allocation3 + $0x10] sm:$0xff]
      %v877 = vld [vmem:[#allocation3 + $0x18] sm:$0xff]
      %v878 = vld [vmem:[#allocation3 + $0x20] sm:$0xff]
      %v879 = vld [vmem:[#allocation3 + $0x28] sm:$0xff]
      %v880 = vld [vmem:[#allocation3 + $0x30] sm:$0xff]
      %v881 = vld [vmem:[#allocation3 + $0x38] sm:$0xff]
      %v882 = vmul.f32 %v795, %v874
      %v883 = vmul.f32 %v797, %v875
      %v884 = vmul.f32 %v799, %v876
      %v885 = vmul.f32 %v801, %v877
      %v886 = vmul.f32 %v803, %v878
      %v887 = vmul.f32 %v805, %v879
      %v888 = vmul.f32 %v807, %v880
      %v889 = vmul.f32 %v809, %v881
      %v890 = vsel %vm753, %v859, 0.0
      %891 = vadd.xlane.f32.xlu0 %v890
      %v892 = vpop.xlane.xlu0 %891
      %v893 = vsel %vm753, %v861, 0.0
      %894 = vadd.xlane.f32.xlu0 %v893
      %v895 = vpop.xlane.xlu0 %894
      %v896 = vsel %vm753, %v863, 0.0
      %897 = vadd.xlane.f32.xlu0 %v896
      %v898 = vpop.xlane.xlu0 %897
      %v899 = vsel %vm753, %v865, 0.0
      %900 = vadd.xlane.f32.xlu0 %v899
      %v901 = vpop.xlane.xlu0 %900
      %v902 = vsel %vm753, %v867, 0.0
      %903 = vadd.xlane.f32.xlu0 %v902
      %v904 = vpop.xlane.xlu0 %903
      %v905 = vsel %vm753, %v869, 0.0
      %906 = vadd.xlane.f32.xlu0 %v905
      %v907 = vpop.xlane.xlu0 %906
      %v908 = vsel %vm753, %v871, 0.0
      %909 = vadd.xlane.f32.xlu0 %v908
      %v910 = vpop.xlane.xlu0 %909
      %v911 = vsel %vm753, %v873, 0.0
      %912 = vadd.xlane.f32.xlu0 %v911
      %v913 = vpop.xlane.xlu0 %912
      %v914 = vadd.f32 %v882, %v892
      %v915 = vadd.f32 %v883, %v895
      %v916 = vadd.f32 %v884, %v898
      %v917 = vadd.f32 %v885, %v901
      %v918 = vadd.f32 %v886, %v904
      %v919 = vadd.f32 %v887, %v907
      %v920 = vadd.f32 %v888, %v910
      %v921 = vadd.f32 %v889, %v913
      %vm922 = vcmask 7168
      %923 = vst.msk [vmem:[#allocation3] sm:$0xff] %vm922, %v914
      %924 = vst.msk [vmem:[#allocation3 + $0x8] sm:$0xff] %vm922, %v915
      %925 = vst.msk [vmem:[#allocation3 + $0x10] sm:$0xff] %vm922, %v916
      %926 = vst.msk [vmem:[#allocation3 + $0x18] sm:$0xff] %vm922, %v917
      %927 = vst.msk [vmem:[#allocation3 + $0x20] sm:$0xff] %vm922, %v918
      %928 = vst.msk [vmem:[#allocation3 + $0x28] sm:$0xff] %vm922, %v919
      %929 = vst.msk [vmem:[#allocation3 + $0x30] sm:$0xff] %vm922, %v920
      %930 = vst.msk [vmem:[#allocation3 + $0x38] sm:$0xff] %vm922, %v921
      %v931 = vld [vmem:[#allocation4] sm:$0xff]
      %v932 = vld [vmem:[#allocation4 + $0x8] sm:$0xff]
      %v933 = vld [vmem:[#allocation4 + $0x10] sm:$0xff]
      %v934 = vld [vmem:[#allocation4 + $0x18] sm:$0xff]
      %v935 = vld [vmem:[#allocation4 + $0x20] sm:$0xff]
      %v936 = vld [vmem:[#allocation4 + $0x28] sm:$0xff]
      %v937 = vld [vmem:[#allocation4 + $0x30] sm:$0xff]
      %v938 = vld [vmem:[#allocation4 + $0x38] sm:$0xff]
      %940 = vset.pattern.permute.xlu0 0
      %941 = vperm.xlu0 %940, %v795
      %v942 = vpop.permute.xlu0 %941
      %945 = vset.pattern.permute.xlu0 0
      %946 = vperm.xlu0 %945, %v797
      %v947 = vpop.permute.xlu0 %946
      %950 = vset.pattern.permute.xlu0 0
      %951 = vperm.xlu0 %950, %v799
      %v952 = vpop.permute.xlu0 %951
      %955 = vset.pattern.permute.xlu0 0
      %956 = vperm.xlu0 %955, %v801
      %v957 = vpop.permute.xlu0 %956
      %960 = vset.pattern.permute.xlu0 0
      %961 = vperm.xlu0 %960, %v803
      %v962 = vpop.permute.xlu0 %961
      %965 = vset.pattern.permute.xlu0 0
      %966 = vperm.xlu0 %965, %v805
      %v967 = vpop.permute.xlu0 %966
      %970 = vset.pattern.permute.xlu0 0
      %971 = vperm.xlu0 %970, %v807
      %v972 = vpop.permute.xlu0 %971
      %975 = vset.pattern.permute.xlu0 0
      %976 = vperm.xlu0 %975, %v809
      %v977 = vpop.permute.xlu0 %976
      %v979 = vmul.f32 %v942, %v931
      %v980 = vmul.f32 %v947, %v932
      %v981 = vmul.f32 %v952, %v933
      %v982 = vmul.f32 %v957, %v934
      %v983 = vmul.f32 %v962, %v935
      %v984 = vmul.f32 %v967, %v936
      %v985 = vmul.f32 %v972, %v937
      %v986 = vmul.f32 %v977, %v938
      %v987 = vld [vmem:[#allocation10] sm:$0xff]
      %v988 = vld [vmem:[#allocation10 + $0x8] sm:$0xff]
      %v989 = vld [vmem:[#allocation10 + $0x10] sm:$0xff]
      %v990 = vld [vmem:[#allocation10 + $0x18] sm:$0xff]
      %v991 = vld [vmem:[#allocation10 + $0x20] sm:$0xff]
      %v992 = vld [vmem:[#allocation10 + $0x28] sm:$0xff]
      %v993 = vld [vmem:[#allocation10 + $0x30] sm:$0xff]
      %v994 = vld [vmem:[#allocation10 + $0x38] sm:$0xff]
      %v996 = vsel %vm753, %v859, 0
      %998 = vmatprep.subr.mxu0 0.0
      %999 = vmatpush1.msra.mxu0 %v987
      %1000 = vmatprep.subr.mxu0 0.0
      %1001 = vmatpush1.msra.mxu0 0.0
      %1002 = vmatprep.subr.mxu0 0.0
      %1003 = vmatpush1.msra.mxu0 0.0
      %1004 = vmatprep.subr.mxu0 0.0
      %1005 = vmatpush1.msra.mxu0 0.0
      %1006 = vmatprep.subr.mxu0 0.0
      %1007 = vmatpush1.msra.mxu0 0.0
      %1008 = vmatprep.subr.mxu0 0.0
      %1009 = vmatpush1.msra.mxu0 0.0
      %1010 = vmatprep.subr.mxu0 0.0
      %1011 = vmatpush1.msra.mxu0 0.0
      %1012 = vmatprep.subr.mxu0 0.0
      %1013 = vmatpush1.msra.mxu0 0.0
      %1014 = vmatprep.subr.mxu0 0.0
      %1015 = vmatpush1.msra.mxu0 0.0
      %1016 = vmatprep.subr.mxu0 0.0
      %1017 = vmatpush1.msra.mxu0 0.0
      %1018 = vmatprep.subr.mxu0 0.0
      %1019 = vmatpush1.msra.mxu0 0.0
      %1020 = vmatprep.subr.mxu0 0.0
      %1021 = vmatpush1.msra.mxu0 0.0
      %1022 = vmatprep.subr.mxu0 0.0
      %1023 = vmatpush1.msra.mxu0 0.0
      %1024 = vmatprep.subr.mxu0 0.0
      %1025 = vmatpush1.msra.mxu0 0.0
      %1026 = vmatprep.subr.mxu0 0.0
      %1027 = vmatpush1.msra.mxu0 0.0
      %1028 = vmatprep.subr.mxu0 0.0
      %1029 = vmatpush1.msra.mxu0 0.0
      %1030 = vmatprep.subr.mxu0 0.0
      %1031 = vmatpush1.msra.mxu0 0.0
      %1032 = vmatprep.subr.mxu0 0.0
      %1033 = vmatpush1.msra.mxu0 0.0
      %1034 = vmatprep.subr.mxu0 0.0
      %1035 = vmatpush1.msra.mxu0 0.0
      %1036 = vmatprep.subr.mxu0 0.0
      %1037 = vmatpush1.msra.mxu0 0.0
      %1038 = vmatprep.subr.mxu0 0.0
      %1039 = vmatpush1.msra.mxu0 0.0
      %1040 = vmatprep.subr.mxu0 0.0
      %1041 = vmatpush1.msra.mxu0 0.0
      %1042 = vmatprep.subr.mxu0 0.0
      %1043 = vmatpush1.msra.mxu0 0.0
      %1044 = vmatprep.subr.mxu0 0.0
      %1045 = vmatpush1.msra.mxu0 0.0
      %1046 = vmatprep.subr.mxu0 0.0
      %1047 = vmatpush1.msra.mxu0 0.0
      %1048 = vmatprep.subr.mxu0 0.0
      %1049 = vmatpush1.msra.mxu0 0.0
      %1050 = vmatprep.subr.mxu0 0.0
      %1051 = vmatpush1.msra.mxu0 0.0
      %1052 = vmatprep.subr.mxu0 0.0
      %1053 = vmatpush1.msra.mxu0 0.0
      %1054 = vmatprep.subr.mxu0 0.0
      %1055 = vmatpush1.msra.mxu0 0.0
      %1056 = vmatprep.subr.mxu0 0.0
      %1057 = vmatpush1.msra.mxu0 0.0
      %1058 = vmatprep.subr.mxu0 0.0
      %1059 = vmatpush1.msra.mxu0 0.0
      %1060 = vmatprep.subr.mxu0 0.0
      %1061 = vmatpush1.msra.mxu0 0.0
      %1062 = vmatprep.mubr.f32.mxu0 0.0
      %1063 = vmatmul.mubr.f32.gmra.mrb[0].mxu0 %v996
      %v1064 = vpop.f32.mrb[0].mxu0
      %v1065 = vadd.f32 0.0, %v1064
      %v1066 = vpop.f32.mrb[0].mxu0
      %1067 = vdwg.mxu0
      %v1069 = vsel %vm753, %v861, 0
      %1071 = vmatprep.subr.mxu0 0.0
      %1072 = vmatpush1.msra.mxu0 %v988
      %1073 = vmatprep.subr.mxu0 0.0
      %1074 = vmatpush1.msra.mxu0 0.0
      %1075 = vmatprep.subr.mxu0 0.0
      %1076 = vmatpush1.msra.mxu0 0.0
      %1077 = vmatprep.subr.mxu0 0.0
      %1078 = vmatpush1.msra.mxu0 0.0
      %1079 = vmatprep.subr.mxu0 0.0
      %1080 = vmatpush1.msra.mxu0 0.0
      %1081 = vmatprep.subr.mxu0 0.0
      %1082 = vmatpush1.msra.mxu0 0.0
      %1083 = vmatprep.subr.mxu0 0.0
      %1084 = vmatpush1.msra.mxu0 0.0
      %1085 = vmatprep.subr.mxu0 0.0
      %1086 = vmatpush1.msra.mxu0 0.0
      %1087 = vmatprep.subr.mxu0 0.0
      %1088 = vmatpush1.msra.mxu0 0.0
      %1089 = vmatprep.subr.mxu0 0.0
      %1090 = vmatpush1.msra.mxu0 0.0
      %1091 = vmatprep.subr.mxu0 0.0
      %1092 = vmatpush1.msra.mxu0 0.0
      %1093 = vmatprep.subr.mxu0 0.0
      %1094 = vmatpush1.msra.mxu0 0.0
      %1095 = vmatprep.subr.mxu0 0.0
      %1096 = vmatpush1.msra.mxu0 0.0
      %1097 = vmatprep.subr.mxu0 0.0
      %1098 = vmatpush1.msra.mxu0 0.0
      %1099 = vmatprep.subr.mxu0 0.0
      %1100 = vmatpush1.msra.mxu0 0.0
      %1101 = vmatprep.subr.mxu0 0.0
      %1102 = vmatpush1.msra.mxu0 0.0
      %1103 = vmatprep.subr.mxu0 0.0
      %1104 = vmatpush1.msra.mxu0 0.0
      %1105 = vmatprep.subr.mxu0 0.0
      %1106 = vmatpush1.msra.mxu0 0.0
      %1107 = vmatprep.subr.mxu0 0.0
      %1108 = vmatpush1.msra.mxu0 0.0
      %1109 = vmatprep.subr.mxu0 0.0
      %1110 = vmatpush1.msra.mxu0 0.0
      %1111 = vmatprep.subr.mxu0 0.0
      %1112 = vmatpush1.msra.mxu0 0.0
      %1113 = vmatprep.subr.mxu0 0.0
      %1114 = vmatpush1.msra.mxu0 0.0
      %1115 = vmatprep.subr.mxu0 0.0
      %1116 = vmatpush1.msra.mxu0 0.0
      %1117 = vmatprep.subr.mxu0 0.0
      %1118 = vmatpush1.msra.mxu0 0.0
      %1119 = vmatprep.subr.mxu0 0.0
      %1120 = vmatpush1.msra.mxu0 0.0
      %1121 = vmatprep.subr.mxu0 0.0
      %1122 = vmatpush1.msra.mxu0 0.0
      %1123 = vmatprep.subr.mxu0 0.0
      %1124 = vmatpush1.msra.mxu0 0.0
      %1125 = vmatprep.subr.mxu0 0.0
      %1126 = vmatpush1.msra.mxu0 0.0
      %1127 = vmatprep.subr.mxu0 0.0
      %1128 = vmatpush1.msra.mxu0 0.0
      %1129 = vmatprep.subr.mxu0 0.0
      %1130 = vmatpush1.msra.mxu0 0.0
      %1131 = vmatprep.subr.mxu0 0.0
      %1132 = vmatpush1.msra.mxu0 0.0
      %1133 = vmatprep.subr.mxu0 0.0
      %1134 = vmatpush1.msra.mxu0 0.0
      %1135 = vmatprep.mubr.f32.mxu0 0.0
      %1136 = vmatmul.mubr.f32.gmra.mrb[0].mxu0 %v1069
      %v1137 = vpop.f32.mrb[0].mxu0
      %v1138 = vadd.f32 0.0, %v1137
      %v1139 = vpop.f32.mrb[0].mxu0
      %1140 = vdwg.mxu0
      %v1142 = vsel %vm753, %v863, 0
      %1144 = vmatprep.subr.mxu0 0.0
      %1145 = vmatpush1.msra.mxu0 %v989
      %1146 = vmatprep.subr.mxu0 0.0
      %1147 = vmatpush1.msra.mxu0 0.0
      %1148 = vmatprep.subr.mxu0 0.0
      %1149 = vmatpush1.msra.mxu0 0.0
      %1150 = vmatprep.subr.mxu0 0.0
      %1151 = vmatpush1.msra.mxu0 0.0
      %1152 = vmatprep.subr.mxu0 0.0
      %1153 = vmatpush1.msra.mxu0 0.0
      %1154 = vmatprep.subr.mxu0 0.0
      %1155 = vmatpush1.msra.mxu0 0.0
      %1156 = vmatprep.subr.mxu0 0.0
      %1157 = vmatpush1.msra.mxu0 0.0
      %1158 = vmatprep.subr.mxu0 0.0
      %1159 = vmatpush1.msra.mxu0 0.0
      %1160 = vmatprep.subr.mxu0 0.0
      %1161 = vmatpush1.msra.mxu0 0.0
      %1162 = vmatprep.subr.mxu0 0.0
      %1163 = vmatpush1.msra.mxu0 0.0
      %1164 = vmatprep.subr.mxu0 0.0
      %1165 = vmatpush1.msra.mxu0 0.0
      %1166 = vmatprep.subr.mxu0 0.0
      %1167 = vmatpush1.msra.mxu0 0.0
      %1168 = vmatprep.subr.mxu0 0.0
      %1169 = vmatpush1.msra.mxu0 0.0
      %1170 = vmatprep.subr.mxu0 0.0
      %1171 = vmatpush1.msra.mxu0 0.0
      %1172 = vmatprep.subr.mxu0 0.0
      %1173 = vmatpush1.msra.mxu0 0.0
      %1174 = vmatprep.subr.mxu0 0.0
      %1175 = vmatpush1.msra.mxu0 0.0
      %1176 = vmatprep.subr.mxu0 0.0
      %1177 = vmatpush1.msra.mxu0 0.0
      %1178 = vmatprep.subr.mxu0 0.0
      %1179 = vmatpush1.msra.mxu0 0.0
      %1180 = vmatprep.subr.mxu0 0.0
      %1181 = vmatpush1.msra.mxu0 0.0
      %1182 = vmatprep.subr.mxu0 0.0
      %1183 = vmatpush1.msra.mxu0 0.0
      %1184 = vmatprep.subr.mxu0 0.0
      %1185 = vmatpush1.msra.mxu0 0.0
      %1186 = vmatprep.subr.mxu0 0.0
      %1187 = vmatpush1.msra.mxu0 0.0
      %1188 = vmatprep.subr.mxu0 0.0
      %1189 = vmatpush1.msra.mxu0 0.0
      %1190 = vmatprep.subr.mxu0 0.0
      %1191 = vmatpush1.msra.mxu0 0.0
      %1192 = vmatprep.subr.mxu0 0.0
      %1193 = vmatpush1.msra.mxu0 0.0
      %1194 = vmatprep.subr.mxu0 0.0
      %1195 = vmatpush1.msra.mxu0 0.0
      %1196 = vmatprep.subr.mxu0 0.0
      %1197 = vmatpush1.msra.mxu0 0.0
      %1198 = vmatprep.subr.mxu0 0.0
      %1199 = vmatpush1.msra.mxu0 0.0
      %1200 = vmatprep.subr.mxu0 0.0
      %1201 = vmatpush1.msra.mxu0 0.0
      %1202 = vmatprep.subr.mxu0 0.0
      %1203 = vmatpush1.msra.mxu0 0.0
      %1204 = vmatprep.subr.mxu0 0.0
      %1205 = vmatpush1.msra.mxu0 0.0
      %1206 = vmatprep.subr.mxu0 0.0
      %1207 = vmatpush1.msra.mxu0 0.0
      %1208 = vmatprep.mubr.f32.mxu0 0.0
      %1209 = vmatmul.mubr.f32.gmra.mrb[0].mxu0 %v1142
      %v1210 = vpop.f32.mrb[0].mxu0
      %v1211 = vadd.f32 0.0, %v1210
      %v1212 = vpop.f32.mrb[0].mxu0
      %1213 = vdwg.mxu0
      %v1215 = vsel %vm753, %v865, 0
      %1217 = vmatprep.subr.mxu0 0.0
      %1218 = vmatpush1.msra.mxu0 %v990
      %1219 = vmatprep.subr.mxu0 0.0
      %1220 = vmatpush1.msra.mxu0 0.0
      %1221 = vmatprep.subr.mxu0 0.0
      %1222 = vmatpush1.msra.mxu0 0.0
      %1223 = vmatprep.subr.mxu0 0.0
      %1224 = vmatpush1.msra.mxu0 0.0
      %1225 = vmatprep.subr.mxu0 0.0
      %1226 = vmatpush1.msra.mxu0 0.0
      %1227 = vmatprep.subr.mxu0 0.0
      %1228 = vmatpush1.msra.mxu0 0.0
      %1229 = vmatprep.subr.mxu0 0.0
      %1230 = vmatpush1.msra.mxu0 0.0
      %1231 = vmatprep.subr.mxu0 0.0
      %1232 = vmatpush1.msra.mxu0 0.0
      %1233 = vmatprep.subr.mxu0 0.0
      %1234 = vmatpush1.msra.mxu0 0.0
      %1235 = vmatprep.subr.mxu0 0.0
      %1236 = vmatpush1.msra.mxu0 0.0
      %1237 = vmatprep.subr.mxu0 0.0
      %1238 = vmatpush1.msra.mxu0 0.0
      %1239 = vmatprep.subr.mxu0 0.0
      %1240 = vmatpush1.msra.mxu0 0.0
      %1241 = vmatprep.subr.mxu0 0.0
      %1242 = vmatpush1.msra.mxu0 0.0
      %1243 = vmatprep.subr.mxu0 0.0
      %1244 = vmatpush1.msra.mxu0 0.0
      %1245 = vmatprep.subr.mxu0 0.0
      %1246 = vmatpush1.msra.mxu0 0.0
      %1247 = vmatprep.subr.mxu0 0.0
      %1248 = vmatpush1.msra.mxu0 0.0
      %1249 = vmatprep.subr.mxu0 0.0
      %1250 = vmatpush1.msra.mxu0 0.0
      %1251 = vmatprep.subr.mxu0 0.0
      %1252 = vmatpush1.msra.mxu0 0.0
      %1253 = vmatprep.subr.mxu0 0.0
      %1254 = vmatpush1.msra.mxu0 0.0
      %1255 = vmatprep.subr.mxu0 0.0
      %1256 = vmatpush1.msra.mxu0 0.0
      %1257 = vmatprep.subr.mxu0 0.0
      %1258 = vmatpush1.msra.mxu0 0.0
      %1259 = vmatprep.subr.mxu0 0.0
      %1260 = vmatpush1.msra.mxu0 0.0
      %1261 = vmatprep.subr.mxu0 0.0
      %1262 = vmatpush1.msra.mxu0 0.0
      %1263 = vmatprep.subr.mxu0 0.0
      %1264 = vmatpush1.msra.mxu0 0.0
      %1265 = vmatprep.subr.mxu0 0.0
      %1266 = vmatpush1.msra.mxu0 0.0
      %1267 = vmatprep.subr.mxu0 0.0
      %1268 = vmatpush1.msra.mxu0 0.0
      %1269 = vmatprep.subr.mxu0 0.0
      %1270 = vmatpush1.msra.mxu0 0.0
      %1271 = vmatprep.subr.mxu0 0.0
      %1272 = vmatpush1.msra.mxu0 0.0
      %1273 = vmatprep.subr.mxu0 0.0
      %1274 = vmatpush1.msra.mxu0 0.0
      %1275 = vmatprep.subr.mxu0 0.0
      %1276 = vmatpush1.msra.mxu0 0.0
      %1277 = vmatprep.subr.mxu0 0.0
      %1278 = vmatpush1.msra.mxu0 0.0
      %1279 = vmatprep.subr.mxu0 0.0
      %1280 = vmatpush1.msra.mxu0 0.0
      %1281 = vmatprep.mubr.f32.mxu0 0.0
      %1282 = vmatmul.mubr.f32.gmra.mrb[0].mxu0 %v1215
      %v1283 = vpop.f32.mrb[0].mxu0
      %v1284 = vadd.f32 0.0, %v1283
      %v1285 = vpop.f32.mrb[0].mxu0
      %1286 = vdwg.mxu0
      %v1288 = vsel %vm753, %v867, 0
      %1290 = vmatprep.subr.mxu0 0.0
      %1291 = vmatpush1.msra.mxu0 %v991
      %1292 = vmatprep.subr.mxu0 0.0
      %1293 = vmatpush1.msra.mxu0 0.0
      %1294 = vmatprep.subr.mxu0 0.0
      %1295 = vmatpush1.msra.mxu0 0.0
      %1296 = vmatprep.subr.mxu0 0.0
      %1297 = vmatpush1.msra.mxu0 0.0
      %1298 = vmatprep.subr.mxu0 0.0
      %1299 = vmatpush1.msra.mxu0 0.0
      %1300 = vmatprep.subr.mxu0 0.0
      %1301 = vmatpush1.msra.mxu0 0.0
      %1302 = vmatprep.subr.mxu0 0.0
      %1303 = vmatpush1.msra.mxu0 0.0
      %1304 = vmatprep.subr.mxu0 0.0
      %1305 = vmatpush1.msra.mxu0 0.0
      %1306 = vmatprep.subr.mxu0 0.0
      %1307 = vmatpush1.msra.mxu0 0.0
      %1308 = vmatprep.subr.mxu0 0.0
      %1309 = vmatpush1.msra.mxu0 0.0
      %1310 = vmatprep.subr.mxu0 0.0
      %1311 = vmatpush1.msra.mxu0 0.0
      %1312 = vmatprep.subr.mxu0 0.0
      %1313 = vmatpush1.msra.mxu0 0.0
      %1314 = vmatprep.subr.mxu0 0.0
      %1315 = vmatpush1.msra.mxu0 0.0
      %1316 = vmatprep.subr.mxu0 0.0
      %1317 = vmatpush1.msra.mxu0 0.0
      %1318 = vmatprep.subr.mxu0 0.0
      %1319 = vmatpush1.msra.mxu0 0.0
      %1320 = vmatprep.subr.mxu0 0.0
      %1321 = vmatpush1.msra.mxu0 0.0
      %1322 = vmatprep.subr.mxu0 0.0
      %1323 = vmatpush1.msra.mxu0 0.0
      %1324 = vmatprep.subr.mxu0 0.0
      %1325 = vmatpush1.msra.mxu0 0.0
      %1326 = vmatprep.subr.mxu0 0.0
      %1327 = vmatpush1.msra.mxu0 0.0
      %1328 = vmatprep.subr.mxu0 0.0
      %1329 = vmatpush1.msra.mxu0 0.0
      %1330 = vmatprep.subr.mxu0 0.0
      %1331 = vmatpush1.msra.mxu0 0.0
      %1332 = vmatprep.subr.mxu0 0.0
      %1333 = vmatpush1.msra.mxu0 0.0
      %1334 = vmatprep.subr.mxu0 0.0
      %1335 = vmatpush1.msra.mxu0 0.0
      %1336 = vmatprep.subr.mxu0 0.0
      %1337 = vmatpush1.msra.mxu0 0.0
      %1338 = vmatprep.subr.mxu0 0.0
      %1339 = vmatpush1.msra.mxu0 0.0
      %1340 = vmatprep.subr.mxu0 0.0
      %1341 = vmatpush1.msra.mxu0 0.0
      %1342 = vmatprep.subr.mxu0 0.0
      %1343 = vmatpush1.msra.mxu0 0.0
      %1344 = vmatprep.subr.mxu0 0.0
      %1345 = vmatpush1.msra.mxu0 0.0
      %1346 = vmatprep.subr.mxu0 0.0
      %1347 = vmatpush1.msra.mxu0 0.0
      %1348 = vmatprep.subr.mxu0 0.0
      %1349 = vmatpush1.msra.mxu0 0.0
      %1350 = vmatprep.subr.mxu0 0.0
      %1351 = vmatpush1.msra.mxu0 0.0
      %1352 = vmatprep.subr.mxu0 0.0
      %1353 = vmatpush1.msra.mxu0 0.0
      %1354 = vmatprep.mubr.f32.mxu0 0.0
      %1355 = vmatmul.mubr.f32.gmra.mrb[0].mxu0 %v1288
      %v1356 = vpop.f32.mrb[0].mxu0
      %v1357 = vadd.f32 0.0, %v1356
      %v1358 = vpop.f32.mrb[0].mxu0
      %1359 = vdwg.mxu0
      %v1361 = vsel %vm753, %v869, 0
      %1363 = vmatprep.subr.mxu0 0.0
      %1364 = vmatpush1.msra.mxu0 %v992
      %1365 = vmatprep.subr.mxu0 0.0
      %1366 = vmatpush1.msra.mxu0 0.0
      %1367 = vmatprep.subr.mxu0 0.0
      %1368 = vmatpush1.msra.mxu0 0.0
      %1369 = vmatprep.subr.mxu0 0.0
      %1370 = vmatpush1.msra.mxu0 0.0
      %1371 = vmatprep.subr.mxu0 0.0
      %1372 = vmatpush1.msra.mxu0 0.0
      %1373 = vmatprep.subr.mxu0 0.0
      %1374 = vmatpush1.msra.mxu0 0.0
      %1375 = vmatprep.subr.mxu0 0.0
      %1376 = vmatpush1.msra.mxu0 0.0
      %1377 = vmatprep.subr.mxu0 0.0
      %1378 = vmatpush1.msra.mxu0 0.0
      %1379 = vmatprep.subr.mxu0 0.0
      %1380 = vmatpush1.msra.mxu0 0.0
      %1381 = vmatprep.subr.mxu0 0.0
      %1382 = vmatpush1.msra.mxu0 0.0
      %1383 = vmatprep.subr.mxu0 0.0
      %1384 = vmatpush1.msra.mxu0 0.0
      %1385 = vmatprep.subr.mxu0 0.0
      %1386 = vmatpush1.msra.mxu0 0.0
      %1387 = vmatprep.subr.mxu0 0.0
      %1388 = vmatpush1.msra.mxu0 0.0
      %1389 = vmatprep.subr.mxu0 0.0
      %1390 = vmatpush1.msra.mxu0 0.0
      %1391 = vmatprep.subr.mxu0 0.0
      %1392 = vmatpush1.msra.mxu0 0.0
      %1393 = vmatprep.subr.mxu0 0.0
      %1394 = vmatpush1.msra.mxu0 0.0
      %1395 = vmatprep.subr.mxu0 0.0
      %1396 = vmatpush1.msra.mxu0 0.0
      %1397 = vmatprep.subr.mxu0 0.0
      %1398 = vmatpush1.msra.mxu0 0.0
      %1399 = vmatprep.subr.mxu0 0.0
      %1400 = vmatpush1.msra.mxu0 0.0
      %1401 = vmatprep.subr.mxu0 0.0
      %1402 = vmatpush1.msra.mxu0 0.0
      %1403 = vmatprep.subr.mxu0 0.0
      %1404 = vmatpush1.msra.mxu0 0.0
      %1405 = vmatprep.subr.mxu0 0.0
      %1406 = vmatpush1.msra.mxu0 0.0
      %1407 = vmatprep.subr.mxu0 0.0
      %1408 = vmatpush1.msra.mxu0 0.0
      %1409 = vmatprep.subr.mxu0 0.0
      %1410 = vmatpush1.msra.mxu0 0.0
      %1411 = vmatprep.subr.mxu0 0.0
      %1412 = vmatpush1.msra.mxu0 0.0
      %1413 = vmatprep.subr.mxu0 0.0
      %1414 = vmatpush1.msra.mxu0 0.0
      %1415 = vmatprep.subr.mxu0 0.0
      %1416 = vmatpush1.msra.mxu0 0.0
      %1417 = vmatprep.subr.mxu0 0.0
      %1418 = vmatpush1.msra.mxu0 0.0
      %1419 = vmatprep.subr.mxu0 0.0
      %1420 = vmatpush1.msra.mxu0 0.0
      %1421 = vmatprep.subr.mxu0 0.0
      %1422 = vmatpush1.msra.mxu0 0.0
      %1423 = vmatprep.subr.mxu0 0.0
      %1424 = vmatpush1.msra.mxu0 0.0
      %1425 = vmatprep.subr.mxu0 0.0
      %1426 = vmatpush1.msra.mxu0 0.0
      %1427 = vmatprep.mubr.f32.mxu0 0.0
      %1428 = vmatmul.mubr.f32.gmra.mrb[0].mxu0 %v1361
      %v1429 = vpop.f32.mrb[0].mxu0
      %v1430 = vadd.f32 0.0, %v1429
      %v1431 = vpop.f32.mrb[0].mxu0
      %1432 = vdwg.mxu0
      %v1434 = vsel %vm753, %v871, 0
      %1436 = vmatprep.subr.mxu0 0.0
      %1437 = vmatpush1.msra.mxu0 %v993
      %1438 = vmatprep.subr.mxu0 0.0
      %1439 = vmatpush1.msra.mxu0 0.0
      %1440 = vmatprep.subr.mxu0 0.0
      %1441 = vmatpush1.msra.mxu0 0.0
      %1442 = vmatprep.subr.mxu0 0.0
      %1443 = vmatpush1.msra.mxu0 0.0
      %1444 = vmatprep.subr.mxu0 0.0
      %1445 = vmatpush1.msra.mxu0 0.0
      %1446 = vmatprep.subr.mxu0 0.0
      %1447 = vmatpush1.msra.mxu0 0.0
      %1448 = vmatprep.subr.mxu0 0.0
      %1449 = vmatpush1.msra.mxu0 0.0
      %1450 = vmatprep.subr.mxu0 0.0
      %1451 = vmatpush1.msra.mxu0 0.0
      %1452 = vmatprep.subr.mxu0 0.0
      %1453 = vmatpush1.msra.mxu0 0.0
      %1454 = vmatprep.subr.mxu0 0.0
      %1455 = vmatpush1.msra.mxu0 0.0
      %1456 = vmatprep.subr.mxu0 0.0
      %1457 = vmatpush1.msra.mxu0 0.0
      %1458 = vmatprep.subr.mxu0 0.0
      %1459 = vmatpush1.msra.mxu0 0.0
      %1460 = vmatprep.subr.mxu0 0.0
      %1461 = vmatpush1.msra.mxu0 0.0
      %1462 = vmatprep.subr.mxu0 0.0
      %1463 = vmatpush1.msra.mxu0 0.0
      %1464 = vmatprep.subr.mxu0 0.0
      %1465 = vmatpush1.msra.mxu0 0.0
      %1466 = vmatprep.subr.mxu0 0.0
      %1467 = vmatpush1.msra.mxu0 0.0
      %1468 = vmatprep.subr.mxu0 0.0
      %1469 = vmatpush1.msra.mxu0 0.0
      %1470 = vmatprep.subr.mxu0 0.0
      %1471 = vmatpush1.msra.mxu0 0.0
      %1472 = vmatprep.subr.mxu0 0.0
      %1473 = vmatpush1.msra.mxu0 0.0
      %1474 = vmatprep.subr.mxu0 0.0
      %1475 = vmatpush1.msra.mxu0 0.0
      %1476 = vmatprep.subr.mxu0 0.0
      %1477 = vmatpush1.msra.mxu0 0.0
      %1478 = vmatprep.subr.mxu0 0.0
      %1479 = vmatpush1.msra.mxu0 0.0
      %1480 = vmatprep.subr.mxu0 0.0
      %1481 = vmatpush1.msra.mxu0 0.0
      %1482 = vmatprep.subr.mxu0 0.0
      %1483 = vmatpush1.msra.mxu0 0.0
      %1484 = vmatprep.subr.mxu0 0.0
      %1485 = vmatpush1.msra.mxu0 0.0
      %1486 = vmatprep.subr.mxu0 0.0
      %1487 = vmatpush1.msra.mxu0 0.0
      %1488 = vmatprep.subr.mxu0 0.0
      %1489 = vmatpush1.msra.mxu0 0.0
      %1490 = vmatprep.subr.mxu0 0.0
      %1491 = vmatpush1.msra.mxu0 0.0
      %1492 = vmatprep.subr.mxu0 0.0
      %1493 = vmatpush1.msra.mxu0 0.0
      %1494 = vmatprep.subr.mxu0 0.0
      %1495 = vmatpush1.msra.mxu0 0.0
      %1496 = vmatprep.subr.mxu0 0.0
      %1497 = vmatpush1.msra.mxu0 0.0
      %1498 = vmatprep.subr.mxu0 0.0
      %1499 = vmatpush1.msra.mxu0 0.0
      %1500 = vmatprep.mubr.f32.mxu0 0.0
      %1501 = vmatmul.mubr.f32.gmra.mrb[0].mxu0 %v1434
      %v1502 = vpop.f32.mrb[0].mxu0
      %v1503 = vadd.f32 0.0, %v1502
      %v1504 = vpop.f32.mrb[0].mxu0
      %1505 = vdwg.mxu0
      %v1507 = vsel %vm753, %v873, 0
      %1509 = vmatprep.subr.mxu0 0.0
      %1510 = vmatpush1.msra.mxu0 %v994
      %1511 = vmatprep.subr.mxu0 0.0
      %1512 = vmatpush1.msra.mxu0 0.0
      %1513 = vmatprep.subr.mxu0 0.0
      %1514 = vmatpush1.msra.mxu0 0.0
      %1515 = vmatprep.subr.mxu0 0.0
      %1516 = vmatpush1.msra.mxu0 0.0
      %1517 = vmatprep.subr.mxu0 0.0
      %1518 = vmatpush1.msra.mxu0 0.0
      %1519 = vmatprep.subr.mxu0 0.0
      %1520 = vmatpush1.msra.mxu0 0.0
      %1521 = vmatprep.subr.mxu0 0.0
      %1522 = vmatpush1.msra.mxu0 0.0
      %1523 = vmatprep.subr.mxu0 0.0
      %1524 = vmatpush1.msra.mxu0 0.0
      %1525 = vmatprep.subr.mxu0 0.0
      %1526 = vmatpush1.msra.mxu0 0.0
      %1527 = vmatprep.subr.mxu0 0.0
      %1528 = vmatpush1.msra.mxu0 0.0
      %1529 = vmatprep.subr.mxu0 0.0
      %1530 = vmatpush1.msra.mxu0 0.0
      %1531 = vmatprep.subr.mxu0 0.0
      %1532 = vmatpush1.msra.mxu0 0.0
      %1533 = vmatprep.subr.mxu0 0.0
      %1534 = vmatpush1.msra.mxu0 0.0
      %1535 = vmatprep.subr.mxu0 0.0
      %1536 = vmatpush1.msra.mxu0 0.0
      %1537 = vmatprep.subr.mxu0 0.0
      %1538 = vmatpush1.msra.mxu0 0.0
      %1539 = vmatprep.subr.mxu0 0.0
      %1540 = vmatpush1.msra.mxu0 0.0
      %1541 = vmatprep.subr.mxu0 0.0
      %1542 = vmatpush1.msra.mxu0 0.0
      %1543 = vmatprep.subr.mxu0 0.0
      %1544 = vmatpush1.msra.mxu0 0.0
      %1545 = vmatprep.subr.mxu0 0.0
      %1546 = vmatpush1.msra.mxu0 0.0
      %1547 = vmatprep.subr.mxu0 0.0
      %1548 = vmatpush1.msra.mxu0 0.0
      %1549 = vmatprep.subr.mxu0 0.0
      %1550 = vmatpush1.msra.mxu0 0.0
      %1551 = vmatprep.subr.mxu0 0.0
      %1552 = vmatpush1.msra.mxu0 0.0
      %1553 = vmatprep.subr.mxu0 0.0
      %1554 = vmatpush1.msra.mxu0 0.0
      %1555 = vmatprep.subr.mxu0 0.0
      %1556 = vmatpush1.msra.mxu0 0.0
      %1557 = vmatprep.subr.mxu0 0.0
      %1558 = vmatpush1.msra.mxu0 0.0
      %1559 = vmatprep.subr.mxu0 0.0
      %1560 = vmatpush1.msra.mxu0 0.0
      %1561 = vmatprep.subr.mxu0 0.0
      %1562 = vmatpush1.msra.mxu0 0.0
      %1563 = vmatprep.subr.mxu0 0.0
      %1564 = vmatpush1.msra.mxu0 0.0
      %1565 = vmatprep.subr.mxu0 0.0
      %1566 = vmatpush1.msra.mxu0 0.0
      %1567 = vmatprep.subr.mxu0 0.0
      %1568 = vmatpush1.msra.mxu0 0.0
      %1569 = vmatprep.subr.mxu0 0.0
      %1570 = vmatpush1.msra.mxu0 0.0
      %1571 = vmatprep.subr.mxu0 0.0
      %1572 = vmatpush1.msra.mxu0 0.0
      %1573 = vmatprep.mubr.f32.mxu0 0.0
      %1574 = vmatmul.mubr.f32.gmra.mrb[0].mxu0 %v1507
      %v1575 = vpop.f32.mrb[0].mxu0
      %v1576 = vadd.f32 0.0, %v1575
      %v1577 = vpop.f32.mrb[0].mxu0
      %1578 = vdwg.mxu0
      %v1579 = vadd.f32 %v979, %v1065
      %v1580 = vadd.f32 %v980, %v1138
      %v1581 = vadd.f32 %v981, %v1211
      %v1582 = vadd.f32 %v982, %v1284
      %v1583 = vadd.f32 %v983, %v1357
      %v1584 = vadd.f32 %v984, %v1430
      %v1585 = vadd.f32 %v985, %v1503
      %v1586 = vadd.f32 %v986, %v1576
      %1587 = vst.msk [vmem:[#allocation4] sm:$0xff] %vm109, %v1579
      %1588 = vst.msk [vmem:[#allocation4 + $0x8] sm:$0xff] %vm109, %v1580
      %1589 = vst.msk [vmem:[#allocation4 + $0x10] sm:$0xff] %vm109, %v1581
      %1590 = vst.msk [vmem:[#allocation4 + $0x18] sm:$0xff] %vm109, %v1582
      %1591 = vst.msk [vmem:[#allocation4 + $0x20] sm:$0xff] %vm109, %v1583
      %1592 = vst.msk [vmem:[#allocation4 + $0x28] sm:$0xff] %vm109, %v1584
      %1593 = vst.msk [vmem:[#allocation4 + $0x30] sm:$0xff] %vm109, %v1585
      %1594 = vst.msk [vmem:[#allocation4 + $0x38] sm:$0xff] %vm109, %v1586
      %1595 = vst.msk [vmem:[#allocation2] sm:$0xff] %vm922, %v778
      %1596 = vst.msk [vmem:[#allocation2 + $0x8] sm:$0xff] %vm922, %v779
      %1597 = vst.msk [vmem:[#allocation2 + $0x10] sm:$0xff] %vm922, %v780
      %1598 = vst.msk [vmem:[#allocation2 + $0x18] sm:$0xff] %vm922, %v781
      %1599 = vst.msk [vmem:[#allocation2 + $0x20] sm:$0xff] %vm922, %v782
      %1600 = vst.msk [vmem:[#allocation2 + $0x28] sm:$0xff] %vm922, %v783
      %1601 = vst.msk [vmem:[#allocation2 + $0x30] sm:$0xff] %vm922, %v784
      %1602 = vst.msk [vmem:[#allocation2 + $0x38] sm:$0xff] %vm922, %v785
    $region33: #{tpu_custom_call.1} parent=1 // pred_fallthru
      _
    // Predicated region
    $region34: #{tpu_custom_call.1} parent=1 // pred_check
      %p1603 = pneg %p56
    $region35: #{tpu_custom_call.1} parent=1 // pred_check_branch
      %1605 = sbr.rel (%p1603) target = $region37
    $region36: #{tpu_custom_call.1} parent=1 // pred_region
      %v1606 = vld [vmem:[#allocation3] sm:$0xff]
      %v1607 = vld [vmem:[#allocation3 + $0x8] sm:$0xff]
      %v1608 = vld [vmem:[#allocation3 + $0x10] sm:$0xff]
      %v1609 = vld [vmem:[#allocation3 + $0x18] sm:$0xff]
      %v1610 = vld [vmem:[#allocation3 + $0x20] sm:$0xff]
      %v1611 = vld [vmem:[#allocation3 + $0x28] sm:$0xff]
      %v1612 = vld [vmem:[#allocation3 + $0x30] sm:$0xff]
      %v1613 = vld [vmem:[#allocation3 + $0x38] sm:$0xff]
      %v1614 = vrcp.pop %v1606
      %v1615 = vrcp.pop %v1607
      %v1616 = vrcp.pop %v1608
      %v1617 = vrcp.pop %v1609
      %v1618 = vrcp.pop %v1610
      %v1619 = vrcp.pop %v1611
      %v1620 = vrcp.pop %v1612
      %v1621 = vrcp.pop %v1613
      %v1622 = vmul.f32 %v1606, %v1614
      %v1623 = vmul.f32 %v1607, %v1615
      %v1624 = vmul.f32 %v1608, %v1616
      %v1625 = vmul.f32 %v1609, %v1617
      %v1626 = vmul.f32 %v1610, %v1618
      %v1627 = vmul.f32 %v1611, %v1619
      %v1628 = vmul.f32 %v1612, %v1620
      %v1629 = vmul.f32 %v1613, %v1621
      %v1630 = vsub.f32 2.0, %v1622
      %v1631 = vsub.f32 2.0, %v1623
      %v1632 = vsub.f32 2.0, %v1624
      %v1633 = vsub.f32 2.0, %v1625
      %v1634 = vsub.f32 2.0, %v1626
      %v1635 = vsub.f32 2.0, %v1627
      %v1636 = vsub.f32 2.0, %v1628
      %v1637 = vsub.f32 2.0, %v1629
      %v1638 = vmul.f32 %v1614, %v1630
      %v1639 = vmul.f32 %v1615, %v1631
      %v1640 = vmul.f32 %v1616, %v1632
      %v1641 = vmul.f32 %v1617, %v1633
      %v1642 = vmul.f32 %v1618, %v1634
      %v1643 = vmul.f32 %v1619, %v1635
      %v1644 = vmul.f32 %v1620, %v1636
      %v1645 = vmul.f32 %v1621, %v1637
      %v1646 = vmul.f32 %v1606, %v1638
      %v1647 = vmul.f32 %v1607, %v1639
      %v1648 = vmul.f32 %v1608, %v1640
      %v1649 = vmul.f32 %v1609, %v1641
      %v1650 = vmul.f32 %v1610, %v1642
      %v1651 = vmul.f32 %v1611, %v1643
      %v1652 = vmul.f32 %v1612, %v1644
      %v1653 = vmul.f32 %v1613, %v1645
      %v1654 = vsub.f32 2.0, %v1646
      %v1655 = vsub.f32 2.0, %v1647
      %v1656 = vsub.f32 2.0, %v1648
      %v1657 = vsub.f32 2.0, %v1649
      %v1658 = vsub.f32 2.0, %v1650
      %v1659 = vsub.f32 2.0, %v1651
      %v1660 = vsub.f32 2.0, %v1652
      %v1661 = vsub.f32 2.0, %v1653
      %v1662 = vmul.f32 %v1638, %v1654
      %v1663 = vmul.f32 %v1639, %v1655
      %v1664 = vmul.f32 %v1640, %v1656
      %v1665 = vmul.f32 %v1641, %v1657
      %v1666 = vmul.f32 %v1642, %v1658
      %v1667 = vmul.f32 %v1643, %v1659
      %v1668 = vmul.f32 %v1644, %v1660
      %v1669 = vmul.f32 %v1645, %v1661
      %v1670 = vld [vmem:[#allocation4] sm:$0xff]
      %v1671 = vld [vmem:[#allocation4 + $0x8] sm:$0xff]
      %v1672 = vld [vmem:[#allocation4 + $0x10] sm:$0xff]
      %v1673 = vld [vmem:[#allocation4 + $0x18] sm:$0xff]
      %v1674 = vld [vmem:[#allocation4 + $0x20] sm:$0xff]
      %v1675 = vld [vmem:[#allocation4 + $0x28] sm:$0xff]
      %v1676 = vld [vmem:[#allocation4 + $0x30] sm:$0xff]
      %v1677 = vld [vmem:[#allocation4 + $0x38] sm:$0xff]
      %1679 = vset.pattern.permute.xlu0 0
      %1680 = vperm.xlu0 %1679, %v1662
      %v1681 = vpop.permute.xlu0 %1680
      %1684 = vset.pattern.permute.xlu0 0
      %1685 = vperm.xlu0 %1684, %v1663
      %v1686 = vpop.permute.xlu0 %1685
      %1689 = vset.pattern.permute.xlu0 0
      %1690 = vperm.xlu0 %1689, %v1664
      %v1691 = vpop.permute.xlu0 %1690
      %1694 = vset.pattern.permute.xlu0 0
      %1695 = vperm.xlu0 %1694, %v1665
      %v1696 = vpop.permute.xlu0 %1695
      %1699 = vset.pattern.permute.xlu0 0
      %1700 = vperm.xlu0 %1699, %v1666
      %v1701 = vpop.permute.xlu0 %1700
      %1704 = vset.pattern.permute.xlu0 0
      %1705 = vperm.xlu0 %1704, %v1667
      %v1706 = vpop.permute.xlu0 %1705
      %1709 = vset.pattern.permute.xlu0 0
      %1710 = vperm.xlu0 %1709, %v1668
      %v1711 = vpop.permute.xlu0 %1710
      %1714 = vset.pattern.permute.xlu0 0
      %1715 = vperm.xlu0 %1714, %v1669
      %v1716 = vpop.permute.xlu0 %1715
      %v1718 = vmul.f32 %v1670, %v1681
      %v1719 = vmul.f32 %v1671, %v1686
      %v1720 = vmul.f32 %v1672, %v1691
      %v1721 = vmul.f32 %v1673, %v1696
      %v1722 = vmul.f32 %v1674, %v1701
      %v1723 = vmul.f32 %v1675, %v1706
      %v1724 = vmul.f32 %v1676, %v1711
      %v1725 = vmul.f32 %v1677, %v1716
      %vm1726 = vcmask 261120
      %1727 = vst.msk [vmem:[#allocation11] sm:$0xff] %vm1726, %v1718
      %1728 = vst.msk [vmem:[#allocation11 + $0x8] sm:$0xff] %vm1726, %v1719
      %1729 = vst.msk [vmem:[#allocation11 + $0x10] sm:$0xff] %vm1726, %v1720
      %1730 = vst.msk [vmem:[#allocation11 + $0x18] sm:$0xff] %vm1726, %v1721
      %1731 = vst.msk [vmem:[#allocation11 + $0x20] sm:$0xff] %vm1726, %v1722
      %1732 = vst.msk [vmem:[#allocation11 + $0x28] sm:$0xff] %vm1726, %v1723
      %1733 = vst.msk [vmem:[#allocation11 + $0x30] sm:$0xff] %vm1726, %v1724
      %1734 = vst.msk [vmem:[#allocation11 + $0x38] sm:$0xff] %vm1726, %v1725
    $region37: #{tpu_custom_call.1} parent=1 // pred_fallthru
      _
    // Predicated region
    $region38: #{tpu_custom_call.1} parent=1 // pred_check
      _
    $region39: #{tpu_custom_call.1} parent=1 // pred_check_branch
      %1736 = sbr.rel (0) target = $region41
    $region40: #{tpu_custom_call.1} parent=1 // pred_region
      %s1738 = ssub.s32 1024, 1024
      %1739 = vsyncadd [#allocation7], %s1738
      %s1740 = sshll.u32 [#allocation11], 4
      %s1741 = int_to_ptr.vmem [resolvable:$true] %s1740
      %1746 = dma.vmem_to_hbm [thread:$0]  %s1741, 1024, %s3, [#allocation7], 128, 128, 8
    $region41: #{tpu_custom_call.1} parent=1 // pred_fallthru
      _
    // Predicated region
    $region42: #{tpu_custom_call.1} parent=1 // pred_check
      _
    $region43: #{tpu_custom_call.1} parent=1 // pred_check_branch
      %1748 = sbr.rel (0) target = $region45
    $region44: #{tpu_custom_call.1} parent=1 // pred_region
      %1749 = dma.done [#allocation7], 1024
    $region45: #{tpu_custom_call.1} parent=1 // pred_fallthru
      _
    %1750 = vsyncpa [#allocation6], 1
    %1751 = vsyncpa [#allocation9], 1
    %1752 = vsyncpa [#allocation7], 1

</llo_original>
